<compile_context>
chip_gen: v6e
topology: v6e:2x2x1
jax: 0.10.0
libtpu: 0.0.40
codegen_flags: <defaults>
</compile_context>

<pallas_src>
import functools

import jax
import jax.numpy as jnp
from jax.experimental import pallas as pl
from jax.experimental.pallas import tpu as pltpu


# -----------------------------------------------------------------------------
# Pallas kernel: one block of T timesteps per grid step (recurrent axis is inner)
# -----------------------------------------------------------------------------
def _lstm_block_kernel(
    xw_ref,                 # (T, TB, 4Hp) bf16  precomputed x@Wx_packed + b_packed
    h0_ref, c0_ref,         # (TB, Hp)     f32   initial state for this batch tile
    wh_ref,                 # (Hp, 4Hp)    bf16  packed recurrent weights [i|f|o|c]
    h_all_ref,              # (T, TB, Hp)  bf16  per-step hidden outputs
    h_out_ref, c_out_ref,   # (TB, Hp)     f32   final state
    h_scr, c_scr,           # (TB, Hp)     f32   VMEM scratch carrying state across blocks
    *, seq_len, t_block, hp, unroll, has_pad,
):
    sb = pl.program_id(1)             # seq-block index (sequential / "arbitrary")
    last = pl.num_programs(1) - 1

    @pl.when(sb == 0)
    def _():
        h_scr[...] = h0_ref[...]
        c_scr[...] = c0_ref[...]

    wh = wh_ref[...]                  # bf16 weights, stays VMEM/vreg resident

    def run_block(masked):
        def step(i, carry):
            h, c = carry              # f32 carries
            # Fused gate pre-activations: (TB, 4Hp) = XW[t] + h @ Wh_packed
            # bf16 MXU operands, f32 accumulation; gate math stays f32.
            gates = xw_ref[i].astype(jnp.float32) + jnp.dot(
                h.astype(jnp.bfloat16), wh, preferred_element_type=jnp.float32)

            # Wide EUP pushes over lane-aligned (multiple-of-128) gate slabs.
            ifo = jax.nn.sigmoid(gates[:, : 3 * hp])
            i_g = ifo[:, 0:hp]
            f_g = ifo[:, hp:2 * hp]
            o_g = ifo[:, 2 * hp:3 * hp]
            c_tilde = jnp.tanh(gates[:, 3 * hp:])

            c_new = f_g * c + i_g * c_tilde
            h_new = o_g * jnp.tanh(c_new)

            if masked:
                # Only the last seq block has padded timesteps: freeze the state there
                # so the returned (H, C) matches the un-padded recurrence exactly.
                valid = (sb * t_block + i) < seq_len
                h_new = jnp.where(valid, h_new, h)
                c_new = jnp.where(valid, c_new, c)

            h_all_ref[i] = h_new.astype(h_all_ref.dtype)
            return h_new, c_new

        h_fin, c_fin = jax.lax.fori_loop(
            0, t_block, step, (h_scr[...], c_scr[...]), unroll=unroll)
        h_scr[...] = h_fin
        c_scr[...] = c_fin

    if has_pad:
        @pl.when(sb != last)
        def _():
            run_block(masked=False)

        @pl.when(sb == last)
        def _():
            run_block(masked=True)
    else:
        run_block(masked=False)

    @pl.when(sb == last)
    def _():
        h_out_ref[...] = h_scr[...]
        c_out_ref[...] = c_scr[...]


def _round_up(x, m):
    return (x + m - 1) // m * m


# -----------------------------------------------------------------------------
# Wrapper reproducing RNNModelScratch.forward semantics (d2l LSTM forward_fn)
# -----------------------------------------------------------------------------
def rnn_model_scratch_forward(X_tokens, state, params, vocab_size, num_hiddens,
                              t_block=16, batch_tile=None):
    """X_tokens: (batch, seq) int32; state: (H, C) each (batch, num_hiddens)."""
    H0, C0 = state
    batch, seq = X_tokens.shape
    H = num_hiddens
    Hp = _round_up(H, 128)            # lane-dense hidden size (no-op when H % 128 == 0)

    (W_xi, W_hi, b_i, W_xf, W_hf, b_f, W_xo, W_ho, b_o,
     W_xc, W_hc, b_c, W_hq, b_q) = params

    def pad_cols(w):                  # (..., H) -> (..., Hp), zero pad
        return jnp.pad(w, [(0, 0)] * (w.ndim - 1) + [(0, Hp - H)])

    def pad_rows(w):                  # (H, ...) -> (Hp, ...), zero pad
        return jnp.pad(w, [(0, Hp - H)] + [(0, 0)] * (w.ndim - 1))

    # Fuse gate weights [i | f | o | c], each block padded to Hp lanes.
    Wx_packed = jnp.concatenate(
        [pad_cols(W_xi), pad_cols(W_xf), pad_cols(W_xo), pad_cols(W_xc)], axis=1)  # (V, 4Hp)
    Wh_packed = jnp.concatenate(
        [pad_rows(pad_cols(W_hi)), pad_rows(pad_cols(W_hf)),
         pad_rows(pad_cols(W_ho)), pad_rows(pad_cols(W_hc))], axis=1)              # (Hp, 4Hp)
    b_packed = jnp.concatenate(
        [pad_cols(b.reshape(1, -1)) for b in (b_i, b_f, b_o, b_c)], axis=1)        # (1, 4Hp)
    W_hq_p = pad_rows(W_hq).astype(jnp.bfloat16)                                   # (Hp, V)
    Wh_bf16 = Wh_packed.astype(jnp.bfloat16)

    # Batch tile: fill the MXU M rows (up to 128); 16-aligned for bf16 sublane tiling.
    if batch_tile is None:
        batch_tile = min(128, _round_up(batch, 16))
    batch_tile = _round_up(max(batch_tile, 16), 16)
    batch_p = _round_up(batch, batch_tile)
    seq_p = _round_up(seq, t_block)
    has_pad = seq_p != seq            # only timestep padding needs in-kernel masking

    Xp = jnp.zeros((batch_p, seq_p), X_tokens.dtype).at[:batch, :seq].set(X_tokens)
    H0p = jnp.zeros((batch_p, Hp), jnp.float32).at[:batch, :H].set(H0)
    C0p = jnp.zeros((batch_p, Hp), jnp.float32).at[:batch, :H].set(C0)

    # Hoisted non-recurrent input projection:
    #   one_hot(X.T, V) @ Wx_packed  ==  row-gather of Wx_packed (no dense one-hot).
    # Streamed into the kernel as bf16 (halves the dominant HBM read).
    XW = (jnp.take(Wx_packed, Xp.T, axis=0) + b_packed).astype(jnp.bfloat16)  # (seq_p, batch_p, 4Hp)

    grid = (batch_p // batch_tile, seq_p // t_block)

    # Cap the in-kernel unroll when the per-step gates tile gets large (avoid vreg spills).
    unroll = True if batch_tile * 4 * Hp <= 64 * 1024 else 4

    kernel = functools.partial(
        _lstm_block_kernel,
        seq_len=seq, t_block=t_block, hp=Hp, unroll=unroll, has_pad=has_pad)

    # Wh_packed has a constant index_map: single-buffer it once it is big enough to matter
    # (double-buffering a 16-32 MiB weight is pure dead VMEM, critical on v7x's 64 MiB).
    wh_bytes = Hp * 4 * Hp * 2
    wh_single = wh_bytes >= (4 << 20)
    if wh_single:
        wh_spec = pl.BlockSpec((Hp, 4 * Hp), lambda bt, sb: (0, 0),
                               pipeline_mode=pl.Buffered(1))
    else:
        wh_spec = pl.BlockSpec((Hp, 4 * Hp), lambda bt, sb: (0, 0))

    grid_spec = pltpu.PrefetchScalarGridSpec(
        num_scalar_prefetch=0,
        grid=grid,
        in_specs=[
            pl.BlockSpec((t_block, batch_tile, 4 * Hp), lambda bt, sb: (sb, bt, 0)),  # XW (bf16)
            pl.BlockSpec((batch_tile, Hp), lambda bt, sb: (bt, 0)),                   # H0 (f32)
            pl.BlockSpec((batch_tile, Hp), lambda bt, sb: (bt, 0)),                   # C0 (f32)
            wh_spec,                                                                  # Wh (bf16)
        ],
        out_specs=[
            pl.BlockSpec((t_block, batch_tile, Hp), lambda bt, sb: (sb, bt, 0)),      # H per step
            pl.BlockSpec((batch_tile, Hp), lambda bt, sb: (bt, 0)),                   # H final
            pl.BlockSpec((batch_tile, Hp), lambda bt, sb: (bt, 0)),                   # C final
        ],
        scratch_shapes=[
            pltpu.VMEM((batch_tile, Hp), jnp.float32),
            pltpu.VMEM((batch_tile, Hp), jnp.float32),
        ],
    )

    # Explicit VMEM budget (re-derived from the block footprint; v7x-safe cap).
    xw_block = t_block * batch_tile * 4 * Hp * 2
    hall_block = t_block * batch_tile * Hp * 2
    state_block = batch_tile * Hp * 4
    vmem_est = (2 * xw_block + 2 * hall_block
                + (1 if wh_single else 2) * wh_bytes
                + 8 * state_block + 2 * state_block)
    vmem_limit = int(min(max(2 * vmem_est, 32 << 20), 64 << 20))

    # Cost hint so XLA can overlap the hoisted gather / output projection with the kernel.
    cost = pl.CostEstimate(
        flops=2 * seq_p * batch_p * Hp * 4 * Hp,
        transcendentals=5 * seq_p * batch_p * Hp,
        bytes_accessed=(XW.size * 2 + seq_p * batch_p * Hp * 2
                        + wh_bytes + 4 * batch_p * Hp * 4),
    )

    H_all, Hf, Cf = pl.pallas_call(
        kernel,
        grid_spec=grid_spec,
        out_shape=(
            jax.ShapeDtypeStruct((seq_p, batch_p, Hp), jnp.bfloat16),
            jax.ShapeDtypeStruct((batch_p, Hp), jnp.float32),
            jax.ShapeDtypeStruct((batch_p, Hp), jnp.float32),
        ),
        compiler_params=pltpu.CompilerParams(
            dimension_semantics=("parallel", "arbitrary"),
            vmem_limit_bytes=vmem_limit,
        ),
        cost_estimate=cost,
    )(XW, H0p, C0p, Wh_bf16)

    # Hoisted output projection: one lane-dense bf16 matmul over the *padded* slab
    # (avoids materializing a gathered copy of h_all before the matmul); slice Y after.
    H_flat = H_all.reshape(seq_p * batch_p, Hp)
    Y_full = jnp.dot(H_flat, W_hq_p, preferred_element_type=jnp.float32)
    if seq_p == seq and batch_p == batch:
        Y = Y_full + b_q.reshape(1, vocab_size)
    else:
        Y = (Y_full.reshape(seq_p, batch_p, vocab_size)[:seq, :batch]
             .reshape(seq * batch, vocab_size) + b_q.reshape(1, vocab_size))
    return Y, (Hf[:batch, :H], Cf[:batch, :H])


# -----------------------------------------------------------------------------
# Deterministic parameter / state construction (mirrors d2l get_lstm_params /
# init_lstm_state: normal(0,1)*0.01 weights, zero biases / state).
# -----------------------------------------------------------------------------
def get_params(key, vocab_size, num_hiddens):
    keys = jax.random.split(key, 9)
    normal = lambda k, shape: jax.random.normal(k, shape, dtype=jnp.float32) * 0.01

    def three(k0, k1):
        return (normal(k0, (vocab_size, num_hiddens)),
                normal(k1, (num_hiddens, num_hiddens)),
                jnp.zeros((num_hiddens,), jnp.float32))

    W_xi, W_hi, b_i = three(keys[0], keys[1])
    W_xf, W_hf, b_f = three(keys[2], keys[3])
    W_xo, W_ho, b_o = three(keys[4], keys[5])
    W_xc, W_hc, b_c = three(keys[6], keys[7])
    W_hq = normal(keys[8], (num_hiddens, vocab_size))
    b_q = jnp.zeros((vocab_size,), jnp.float32)
    return [W_xi, W_hi, b_i, W_xf, W_hf, b_f, W_xo, W_ho, b_o,
            W_xc, W_hc, b_c, W_hq, b_q]


def begin_state(batch_size, num_hiddens):
    return (jnp.zeros((batch_size, num_hiddens), jnp.float32),
            jnp.zeros((batch_size, num_hiddens), jnp.float32))


# Pure-JAX reference (same math as the PyTorch lstm forward_fn) for validation.
def lstm_ref(X_tokens, state, params, vocab_size):
    (W_xi, W_hi, b_i, W_xf, W_hf, b_f, W_xo, W_ho, b_o,
     W_xc, W_hc, b_c, W_hq, b_q) = params
    H, C = state
    X_onehot = jax.nn.one_hot(X_tokens.T, vocab_size, dtype=jnp.float32)
    outputs = []
    for t in range(X_onehot.shape[0]):
        X = X_onehot[t]
        I = jax.nn.sigmoid(X @ W_xi + H @ W_hi + b_i)
        F = jax.nn.sigmoid(X @ W_xf + H @ W_hf + b_f)
        O = jax.nn.sigmoid(X @ W_xo + H @ W_ho + b_o)
        C_t = jnp.tanh(X @ W_xc + H @ W_hc + b_c)
        C = F * C + I * C_t
        H = O * jnp.tanh(C)
        outputs.append(H @ W_hq + b_q)
    return jnp.concatenate(outputs, axis=0), (H, C)


def _check(X_tokens, state, params, vocab_size, num_hiddens, **kw):
    fwd = jax.jit(functools.partial(rnn_model_scratch_forward,
                                    vocab_size=vocab_size, num_hiddens=num_hiddens, **kw))
    Y, (Hn, Cn) = fwd(X_tokens, state, params)
    jax.block_until_ready((Y, Hn, Cn))
    Y_ref, (H_ref, C_ref) = lstm_ref(X_tokens, state, params, vocab_size)
    batch, seq = X_tokens.shape
    assert Y.shape == (seq * batch, vocab_size)
    assert Hn.shape == (batch, num_hiddens) and Cn.shape == (batch, num_hiddens)
    # bf16 MXU operands -> relaxed (but still tight for these magnitudes) tolerances.
    assert jnp.allclose(Y, Y_ref, atol=3e-3, rtol=3e-2)
    assert jnp.allclose(Hn, H_ref, atol=3e-3, rtol=3e-2)
    assert jnp.allclose(Cn, C_ref, atol=3e-3, rtol=3e-2)


if __name__ == "__main__":
    vocab_size = 16
    num_hiddens = 32

    key = jax.random.PRNGKey(0)
    k_params, k1, k2, k3 = jax.random.split(key, 4)
    params = get_params(k_params, vocab_size, num_hiddens)

    # Case 1: batch=2, seq=8, t_block=8 (no seq padding; single seq block).
    X1 = jax.random.randint(k1, (2, 8), 0, vocab_size, dtype=jnp.int32)
    _check(X1, begin_state(2, num_hiddens), params, vocab_size, num_hiddens, t_block=8)

    # Case 2: batch=3, seq=5, t_block=4 (batch + seq padding, masked tail, two seq
    # blocks carrying state through VMEM scratch).
    X2 = jax.random.randint(k2, (3, 5), 0, vocab_size, dtype=jnp.int32)
    _check(X2, begin_state(3, num_hiddens), params, vocab_size, num_hiddens, t_block=4)

    # Case 3: defaults (t_block=16, auto batch_tile): batch=5, seq=24 -> two seq blocks,
    # masked final block.
    X3 = jax.random.randint(k3, (5, 24), 0, vocab_size, dtype=jnp.int32)
    _check(X3, begin_state(5, num_hiddens), params, vocab_size, num_hiddens)

    print("KERNEL_OK")
</pallas_src>

<mosaic_0001>
module attributes {stable_mosaic.version = 11 : i64} {
  func.func @_lstm_block_kernel(%arg0: i32, %arg1: i32, %arg2: memref<8x16x512xbf16, #tpu.memory_space<vmem>>, %arg3: memref<16x128xf32, #tpu.memory_space<vmem>>, %arg4: memref<16x128xf32, #tpu.memory_space<vmem>>, %arg5: memref<128x512xbf16, #tpu.memory_space<vmem>>, %arg6: memref<8x16x128xbf16, #tpu.memory_space<vmem>>, %arg7: memref<16x128xf32, #tpu.memory_space<vmem>>, %arg8: memref<16x128xf32, #tpu.memory_space<vmem>>, %arg9: memref<16x128xf32, #tpu.memory_space<vmem>>, %arg10: memref<16x128xf32, #tpu.memory_space<vmem>>) attributes {dimension_semantics = [#tpu.dimension_semantics<parallel>, #tpu.dimension_semantics<arbitrary>], iteration_bounds = array<i64: 1, 1>, scalar_prefetch = 0 : i64, scratch_operands = 2 : i64, tpu.core_type = #tpu.core_type<tc>, window_params = [{transform_indices = @transform_0, window_bounds = array<i64: 8, 16, 512>}, {transform_indices = @transform_1, window_bounds = array<i64: 16, 128>}, {transform_indices = @transform_2, window_bounds = array<i64: 16, 128>}, {pipeline_mode = #tpu.pipeline_mode<synchronous>, transform_indices = @transform_3, window_bounds = array<i64: 128, 512>}, {transform_indices = @transform_4, window_bounds = array<i64: 8, 16, 128>}, {transform_indices = @transform_5, window_bounds = array<i64: 16, 128>}, {transform_indices = @transform_6, window_bounds = array<i64: 16, 128>}]} {
    %c0_i32 = arith.constant 0 : i32
    %0 = arith.cmpi eq, %arg1, %c0_i32 : i32
    %1 = arith.extui %0 : i1 to i32
    %c0_i32_0 = arith.constant 0 : i32
    %2 = arith.cmpi ne, %1, %c0_i32_0 : i32
    scf.if %2 {
      %c0_60 = arith.constant 0 : index
      %c0_61 = arith.constant 0 : index
      %235 = vector.load %arg3[%c0_60, %c0_61] : memref<16x128xf32, #tpu.memory_space<vmem>>, vector<16x128xf32>
      %c0_62 = arith.constant 0 : index
      %c0_63 = arith.constant 0 : index
      %236 = vector.load %arg9[%c0_62, %c0_63] : memref<16x128xf32, #tpu.memory_space<vmem>>, vector<16x128xf32>
      tpu.vector_store %arg9[%c0_62, %c0_63], %235 {strides = array<i32>} : memref<16x128xf32, #tpu.memory_space<vmem>>, vector<16x128xf32>,
      %c0_64 = arith.constant 0 : index
      %c0_65 = arith.constant 0 : index
      %237 = vector.load %arg4[%c0_64, %c0_65] : memref<16x128xf32, #tpu.memory_space<vmem>>, vector<16x128xf32>
      %c0_66 = arith.constant 0 : index
      %c0_67 = arith.constant 0 : index
      %238 = vector.load %arg10[%c0_66, %c0_67] : memref<16x128xf32, #tpu.memory_space<vmem>>, vector<16x128xf32>
      tpu.vector_store %arg10[%c0_66, %c0_67], %237 {strides = array<i32>} : memref<16x128xf32, #tpu.memory_space<vmem>>, vector<16x128xf32>,
    } else {
    }
    %c0 = arith.constant 0 : index
    %c0_1 = arith.constant 0 : index
    %3 = vector.load %arg5[%c0, %c0_1] : memref<128x512xbf16, #tpu.memory_space<vmem>>, vector<128x512xbf16>
    %c0_2 = arith.constant 0 : index
    %c0_3 = arith.constant 0 : index
    %4 = vector.load %arg9[%c0_2, %c0_3] : memref<16x128xf32, #tpu.memory_space<vmem>>, vector<16x128xf32>
    %c0_4 = arith.constant 0 : index
    %c0_5 = arith.constant 0 : index
    %5 = vector.load %arg10[%c0_4, %c0_5] : memref<16x128xf32, #tpu.memory_space<vmem>>, vector<16x128xf32>
    %c0_i32_6 = arith.constant 0 : i32
    %6 = arith.index_cast %c0_i32_6 : i32 to index
    %c0_7 = arith.constant 0 : index
    %c0_8 = arith.constant 0 : index
    %7 = vector.load %arg2[%6, %c0_7, %c0_8] : memref<8x16x512xbf16, #tpu.memory_space<vmem>>, vector<1x16x512xbf16>
    %8 = vector.shape_cast %7 : vector<1x16x512xbf16> to vector<16x512xbf16>
    %9 = arith.extf %8 : vector<16x512xbf16> to vector<16x512xf32>
    %10 = arith.truncf %4 : vector<16x128xf32> to vector<16x128xbf16>
    %cst = arith.constant dense<0.000000e+00> : vector<16x512xf32>
    %11 = tpu.matmul %10, %3, %cst {dimension_numbers = #tpu.dot_dimension_numbers<[1], [0], [0], [1], [0, 0, 1, 1], [], []>} : vector<16x128xbf16>, vector<128x512xbf16>, vector<16x512xf32> -> vector<16x512xf32>
    %12 = arith.addf %9, %11 : vector<16x512xf32>
    %13 = vector.extract_strided_slice %12 {offsets = [0, 0], sizes = [16, 384], strides = [1, 1]} : vector<16x512xf32> to vector<16x384xf32>
    %14 = arith.negf %13 : vector<16x384xf32>
    %15 = math.exp %14 : vector<16x384xf32>
    %cst_9 = arith.constant 1.000000e+00 : f32
    %16 = vector.broadcast %cst_9 : f32 to vector<16x384xf32>
    %17 = arith.addf %16, %15 : vector<16x384xf32>
    %18 = arith.divf %16, %17 : vector<16x384xf32>
    %19 = vector.extract_strided_slice %18 {offsets = [0, 0], sizes = [16, 128], strides = [1, 1]} : vector<16x384xf32> to vector<16x128xf32>
    %20 = vector.extract_strided_slice %18 {offsets = [0, 128], sizes = [16, 128], strides = [1, 1]} : vector<16x384xf32> to vector<16x128xf32>
    %21 = vector.extract_strided_slice %18 {offsets = [0, 256], sizes = [16, 128], strides = [1, 1]} : vector<16x384xf32> to vector<16x128xf32>
    %22 = vector.extract_strided_slice %12 {offsets = [0, 384], sizes = [16, 128], strides = [1, 1]} : vector<16x512xf32> to vector<16x128xf32>
    %23 = math.tanh %22 : vector<16x128xf32>
    %24 = arith.mulf %20, %5 : vector<16x128xf32>
    %25 = arith.mulf %19, %23 : vector<16x128xf32>
    %26 = arith.addf %24, %25 : vector<16x128xf32>
    %27 = math.tanh %26 : vector<16x128xf32>
    %28 = arith.mulf %21, %27 : vector<16x128xf32>
    %29 = arith.truncf %28 : vector<16x128xf32> to vector<16x128xbf16>
    %30 = arith.index_cast %c0_i32_6 : i32 to index
    %c0_10 = arith.constant 0 : index
    %c0_11 = arith.constant 0 : index
    %31 = vector.load %arg6[%30, %c0_10, %c0_11] : memref<8x16x128xbf16, #tpu.memory_space<vmem>>, vector<1x16x128xbf16>
    %32 = vector.shape_cast %31 : vector<1x16x128xbf16> to vector<16x128xbf16>
    %33 = vector.shape_cast %29 : vector<16x128xbf16> to vector<1x16x128xbf16>
    tpu.vector_store %arg6[%30, %c0_10, %c0_11], %33 {strides = array<i32>} : memref<8x16x128xbf16, #tpu.memory_space<vmem>>, vector<1x16x128xbf16>,
    %c1_i32 = arith.constant 1 : i32
    %34 = arith.index_cast %c1_i32 : i32 to index
    %c0_12 = arith.constant 0 : index
    %c0_13 = arith.constant 0 : index
    %35 = vector.load %arg2[%34, %c0_12, %c0_13] : memref<8x16x512xbf16, #tpu.memory_space<vmem>>, vector<1x16x512xbf16>
    %36 = vector.shape_cast %35 : vector<1x16x512xbf16> to vector<16x512xbf16>
    %37 = arith.extf %36 : vector<16x512xbf16> to vector<16x512xf32>
    %38 = arith.truncf %28 : vector<16x128xf32> to vector<16x128xbf16>
    %cst_14 = arith.constant dense<0.000000e+00> : vector<16x512xf32>
    %39 = tpu.matmul %38, %3, %cst_14 {dimension_numbers = #tpu.dot_dimension_numbers<[1], [0], [0], [1], [0, 0, 1, 1], [], []>} : vector<16x128xbf16>, vector<128x512xbf16>, vector<16x512xf32> -> vector<16x512xf32>
    %40 = arith.addf %37, %39 : vector<16x512xf32>
    %41 = vector.extract_strided_slice %40 {offsets = [0, 0], sizes = [16, 384], strides = [1, 1]} : vector<16x512xf32> to vector<16x384xf32>
    %42 = arith.negf %41 : vector<16x384xf32>
    %43 = math.exp %42 : vector<16x384xf32>
    %cst_15 = arith.constant 1.000000e+00 : f32
    %44 = vector.broadcast %cst_15 : f32 to vector<16x384xf32>
    %45 = arith.addf %44, %43 : vector<16x384xf32>
    %46 = arith.divf %44, %45 : vector<16x384xf32>
    %47 = vector.extract_strided_slice %46 {offsets = [0, 0], sizes = [16, 128], strides = [1, 1]} : vector<16x384xf32> to vector<16x128xf32>
    %48 = vector.extract_strided_slice %46 {offsets = [0, 128], sizes = [16, 128], strides = [1, 1]} : vector<16x384xf32> to vector<16x128xf32>
    %49 = vector.extract_strided_slice %46 {offsets = [0, 256], sizes = [16, 128], strides = [1, 1]} : vector<16x384xf32> to vector<16x128xf32>
    %50 = vector.extract_strided_slice %40 {offsets = [0, 384], sizes = [16, 128], strides = [1, 1]} : vector<16x512xf32> to vector<16x128xf32>
    %51 = math.tanh %50 : vector<16x128xf32>
    %52 = arith.mulf %48, %26 : vector<16x128xf32>
    %53 = arith.mulf %47, %51 : vector<16x128xf32>
    %54 = arith.addf %52, %53 : vector<16x128xf32>
    %55 = math.tanh %54 : vector<16x128xf32>
    %56 = arith.mulf %49, %55 : vector<16x128xf32>
    %57 = arith.truncf %56 : vector<16x128xf32> to vector<16x128xbf16>
    %58 = arith.index_cast %c1_i32 : i32 to index
    %c0_16 = arith.constant 0 : index
    %c0_17 = arith.constant 0 : index
    %59 = vector.load %arg6[%58, %c0_16, %c0_17] : memref<8x16x128xbf16, #tpu.memory_space<vmem>>, vector<1x16x128xbf16>
    %60 = vector.shape_cast %59 : vector<1x16x128xbf16> to vector<16x128xbf16>
    %61 = vector.shape_cast %57 : vector<16x128xbf16> to vector<1x16x128xbf16>
    tpu.vector_store %arg6[%58, %c0_16, %c0_17], %61 {strides = array<i32>} : memref<8x16x128xbf16, #tpu.memory_space<vmem>>, vector<1x16x128xbf16>,
    %c2_i32 = arith.constant 2 : i32
    %62 = arith.index_cast %c2_i32 : i32 to index
    %c0_18 = arith.constant 0 : index
    %c0_19 = arith.constant 0 : index
    %63 = vector.load %arg2[%62, %c0_18, %c0_19] : memref<8x16x512xbf16, #tpu.memory_space<vmem>>, vector<1x16x512xbf16>
    %64 = vector.shape_cast %63 : vector<1x16x512xbf16> to vector<16x512xbf16>
    %65 = arith.extf %64 : vector<16x512xbf16> to vector<16x512xf32>
    %66 = arith.truncf %56 : vector<16x128xf32> to vector<16x128xbf16>
    %cst_20 = arith.constant dense<0.000000e+00> : vector<16x512xf32>
    %67 = tpu.matmul %66, %3, %cst_20 {dimension_numbers = #tpu.dot_dimension_numbers<[1], [0], [0], [1], [0, 0, 1, 1], [], []>} : vector<16x128xbf16>, vector<128x512xbf16>, vector<16x512xf32> -> vector<16x512xf32>
    %68 = arith.addf %65, %67 : vector<16x512xf32>
    %69 = vector.extract_strided_slice %68 {offsets = [0, 0], sizes = [16, 384], strides = [1, 1]} : vector<16x512xf32> to vector<16x384xf32>
    %70 = arith.negf %69 : vector<16x384xf32>
    %71 = math.exp %70 : vector<16x384xf32>
    %cst_21 = arith.constant 1.000000e+00 : f32
    %72 = vector.broadcast %cst_21 : f32 to vector<16x384xf32>
    %73 = arith.addf %72, %71 : vector<16x384xf32>
    %74 = arith.divf %72, %73 : vector<16x384xf32>
    %75 = vector.extract_strided_slice %74 {offsets = [0, 0], sizes = [16, 128], strides = [1, 1]} : vector<16x384xf32> to vector<16x128xf32>
    %76 = vector.extract_strided_slice %74 {offsets = [0, 128], sizes = [16, 128], strides = [1, 1]} : vector<16x384xf32> to vector<16x128xf32>
    %77 = vector.extract_strided_slice %74 {offsets = [0, 256], sizes = [16, 128], strides = [1, 1]} : vector<16x384xf32> to vector<16x128xf32>
    %78 = vector.extract_strided_slice %68 {offsets = [0, 384], sizes = [16, 128], strides = [1, 1]} : vector<16x512xf32> to vector<16x128xf32>
    %79 = math.tanh %78 : vector<16x128xf32>
    %80 = arith.mulf %76, %54 : vector<16x128xf32>
    %81 = arith.mulf %75, %79 : vector<16x128xf32>
    %82 = arith.addf %80, %81 : vector<16x128xf32>
    %83 = math.tanh %82 : vector<16x128xf32>
    %84 = arith.mulf %77, %83 : vector<16x128xf32>
    %85 = arith.truncf %84 : vector<16x128xf32> to vector<16x128xbf16>
    %86 = arith.index_cast %c2_i32 : i32 to index
    %c0_22 = arith.constant 0 : index
    %c0_23 = arith.constant 0 : index
    %87 = vector.load %arg6[%86, %c0_22, %c0_23] : memref<8x16x128xbf16, #tpu.memory_space<vmem>>, vector<1x16x128xbf16>
    %88 = vector.shape_cast %87 : vector<1x16x128xbf16> to vector<16x128xbf16>
    %89 = vector.shape_cast %85 : vector<16x128xbf16> to vector<1x16x128xbf16>
    tpu.vector_store %arg6[%86, %c0_22, %c0_23], %89 {strides = array<i32>} : memref<8x16x128xbf16, #tpu.memory_space<vmem>>, vector<1x16x128xbf16>,
    %c3_i32 = arith.constant 3 : i32
    %90 = arith.index_cast %c3_i32 : i32 to index
    %c0_24 = arith.constant 0 : index
    %c0_25 = arith.constant 0 : index
    %91 = vector.load %arg2[%90, %c0_24, %c0_25] : memref<8x16x512xbf16, #tpu.memory_space<vmem>>, vector<1x16x512xbf16>
    %92 = vector.shape_cast %91 : vector<1x16x512xbf16> to vector<16x512xbf16>
    %93 = arith.extf %92 : vector<16x512xbf16> to vector<16x512xf32>
    %94 = arith.truncf %84 : vector<16x128xf32> to vector<16x128xbf16>
    %cst_26 = arith.constant dense<0.000000e+00> : vector<16x512xf32>
    %95 = tpu.matmul %94, %3, %cst_26 {dimension_numbers = #tpu.dot_dimension_numbers<[1], [0], [0], [1], [0, 0, 1, 1], [], []>} : vector<16x128xbf16>, vector<128x512xbf16>, vector<16x512xf32> -> vector<16x512xf32>
    %96 = arith.addf %93, %95 : vector<16x512xf32>
    %97 = vector.extract_strided_slice %96 {offsets = [0, 0], sizes = [16, 384], strides = [1, 1]} : vector<16x512xf32> to vector<16x384xf32>
    %98 = arith.negf %97 : vector<16x384xf32>
    %99 = math.exp %98 : vector<16x384xf32>
    %cst_27 = arith.constant 1.000000e+00 : f32
    %100 = vector.broadcast %cst_27 : f32 to vector<16x384xf32>
    %101 = arith.addf %100, %99 : vector<16x384xf32>
    %102 = arith.divf %100, %101 : vector<16x384xf32>
    %103 = vector.extract_strided_slice %102 {offsets = [0, 0], sizes = [16, 128], strides = [1, 1]} : vector<16x384xf32> to vector<16x128xf32>
    %104 = vector.extract_strided_slice %102 {offsets = [0, 128], sizes = [16, 128], strides = [1, 1]} : vector<16x384xf32> to vector<16x128xf32>
    %105 = vector.extract_strided_slice %102 {offsets = [0, 256], sizes = [16, 128], strides = [1, 1]} : vector<16x384xf32> to vector<16x128xf32>
    %106 = vector.extract_strided_slice %96 {offsets = [0, 384], sizes = [16, 128], strides = [1, 1]} : vector<16x512xf32> to vector<16x128xf32>
    %107 = math.tanh %106 : vector<16x128xf32>
    %108 = arith.mulf %104, %82 : vector<16x128xf32>
    %109 = arith.mulf %103, %107 : vector<16x128xf32>
    %110 = arith.addf %108, %109 : vector<16x128xf32>
    %111 = math.tanh %110 : vector<16x128xf32>
    %112 = arith.mulf %105, %111 : vector<16x128xf32>
    %113 = arith.truncf %112 : vector<16x128xf32> to vector<16x128xbf16>
    %114 = arith.index_cast %c3_i32 : i32 to index
    %c0_28 = arith.constant 0 : index
    %c0_29 = arith.constant 0 : index
    %115 = vector.load %arg6[%114, %c0_28, %c0_29] : memref<8x16x128xbf16, #tpu.memory_space<vmem>>, vector<1x16x128xbf16>
    %116 = vector.shape_cast %115 : vector<1x16x128xbf16> to vector<16x128xbf16>
    %117 = vector.shape_cast %113 : vector<16x128xbf16> to vector<1x16x128xbf16>
    tpu.vector_store %arg6[%114, %c0_28, %c0_29], %117 {strides = array<i32>} : memref<8x16x128xbf16, #tpu.memory_space<vmem>>, vector<1x16x128xbf16>,
    %c4_i32 = arith.constant 4 : i32
    %118 = arith.index_cast %c4_i32 : i32 to index
    %c0_30 = arith.constant 0 : index
    %c0_31 = arith.constant 0 : index
    %119 = vector.load %arg2[%118, %c0_30, %c0_31] : memref<8x16x512xbf16, #tpu.memory_space<vmem>>, vector<1x16x512xbf16>
    %120 = vector.shape_cast %119 : vector<1x16x512xbf16> to vector<16x512xbf16>
    %121 = arith.extf %120 : vector<16x512xbf16> to vector<16x512xf32>
    %122 = arith.truncf %112 : vector<16x128xf32> to vector<16x128xbf16>
    %cst_32 = arith.constant dense<0.000000e+00> : vector<16x512xf32>
    %123 = tpu.matmul %122, %3, %cst_32 {dimension_numbers = #tpu.dot_dimension_numbers<[1], [0], [0], [1], [0, 0, 1, 1], [], []>} : vector<16x128xbf16>, vector<128x512xbf16>, vector<16x512xf32> -> vector<16x512xf32>
    %124 = arith.addf %121, %123 : vector<16x512xf32>
    %125 = vector.extract_strided_slice %124 {offsets = [0, 0], sizes = [16, 384], strides = [1, 1]} : vector<16x512xf32> to vector<16x384xf32>
    %126 = arith.negf %125 : vector<16x384xf32>
    %127 = math.exp %126 : vector<16x384xf32>
    %cst_33 = arith.constant 1.000000e+00 : f32
    %128 = vector.broadcast %cst_33 : f32 to vector<16x384xf32>
    %129 = arith.addf %128, %127 : vector<16x384xf32>
    %130 = arith.divf %128, %129 : vector<16x384xf32>
    %131 = vector.extract_strided_slice %130 {offsets = [0, 0], sizes = [16, 128], strides = [1, 1]} : vector<16x384xf32> to vector<16x128xf32>
    %132 = vector.extract_strided_slice %130 {offsets = [0, 128], sizes = [16, 128], strides = [1, 1]} : vector<16x384xf32> to vector<16x128xf32>
    %133 = vector.extract_strided_slice %130 {offsets = [0, 256], sizes = [16, 128], strides = [1, 1]} : vector<16x384xf32> to vector<16x128xf32>
    %134 = vector.extract_strided_slice %124 {offsets = [0, 384], sizes = [16, 128], strides = [1, 1]} : vector<16x512xf32> to vector<16x128xf32>
    %135 = math.tanh %134 : vector<16x128xf32>
    %136 = arith.mulf %132, %110 : vector<16x128xf32>
    %137 = arith.mulf %131, %135 : vector<16x128xf32>
    %138 = arith.addf %136, %137 : vector<16x128xf32>
    %139 = math.tanh %138 : vector<16x128xf32>
    %140 = arith.mulf %133, %139 : vector<16x128xf32>
    %141 = arith.truncf %140 : vector<16x128xf32> to vector<16x128xbf16>
    %142 = arith.index_cast %c4_i32 : i32 to index
    %c0_34 = arith.constant 0 : index
    %c0_35 = arith.constant 0 : index
    %143 = vector.load %arg6[%142, %c0_34, %c0_35] : memref<8x16x128xbf16, #tpu.memory_space<vmem>>, vector<1x16x128xbf16>
    %144 = vector.shape_cast %143 : vector<1x16x128xbf16> to vector<16x128xbf16>
    %145 = vector.shape_cast %141 : vector<16x128xbf16> to vector<1x16x128xbf16>
    tpu.vector_store %arg6[%142, %c0_34, %c0_35], %145 {strides = array<i32>} : memref<8x16x128xbf16, #tpu.memory_space<vmem>>, vector<1x16x128xbf16>,
    %c5_i32 = arith.constant 5 : i32
    %146 = arith.index_cast %c5_i32 : i32 to index
    %c0_36 = arith.constant 0 : index
    %c0_37 = arith.constant 0 : index
    %147 = vector.load %arg2[%146, %c0_36, %c0_37] : memref<8x16x512xbf16, #tpu.memory_space<vmem>>, vector<1x16x512xbf16>
    %148 = vector.shape_cast %147 : vector<1x16x512xbf16> to vector<16x512xbf16>
    %149 = arith.extf %148 : vector<16x512xbf16> to vector<16x512xf32>
    %150 = arith.truncf %140 : vector<16x128xf32> to vector<16x128xbf16>
    %cst_38 = arith.constant dense<0.000000e+00> : vector<16x512xf32>
    %151 = tpu.matmul %150, %3, %cst_38 {dimension_numbers = #tpu.dot_dimension_numbers<[1], [0], [0], [1], [0, 0, 1, 1], [], []>} : vector<16x128xbf16>, vector<128x512xbf16>, vector<16x512xf32> -> vector<16x512xf32>
    %152 = arith.addf %149, %151 : vector<16x512xf32>
    %153 = vector.extract_strided_slice %152 {offsets = [0, 0], sizes = [16, 384], strides = [1, 1]} : vector<16x512xf32> to vector<16x384xf32>
    %154 = arith.negf %153 : vector<16x384xf32>
    %155 = math.exp %154 : vector<16x384xf32>
    %cst_39 = arith.constant 1.000000e+00 : f32
    %156 = vector.broadcast %cst_39 : f32 to vector<16x384xf32>
    %157 = arith.addf %156, %155 : vector<16x384xf32>
    %158 = arith.divf %156, %157 : vector<16x384xf32>
    %159 = vector.extract_strided_slice %158 {offsets = [0, 0], sizes = [16, 128], strides = [1, 1]} : vector<16x384xf32> to vector<16x128xf32>
    %160 = vector.extract_strided_slice %158 {offsets = [0, 128], sizes = [16, 128], strides = [1, 1]} : vector<16x384xf32> to vector<16x128xf32>
    %161 = vector.extract_strided_slice %158 {offsets = [0, 256], sizes = [16, 128], strides = [1, 1]} : vector<16x384xf32> to vector<16x128xf32>
    %162 = vector.extract_strided_slice %152 {offsets = [0, 384], sizes = [16, 128], strides = [1, 1]} : vector<16x512xf32> to vector<16x128xf32>
    %163 = math.tanh %162 : vector<16x128xf32>
    %164 = arith.mulf %160, %138 : vector<16x128xf32>
    %165 = arith.mulf %159, %163 : vector<16x128xf32>
    %166 = arith.addf %164, %165 : vector<16x128xf32>
    %167 = math.tanh %166 : vector<16x128xf32>
    %168 = arith.mulf %161, %167 : vector<16x128xf32>
    %169 = arith.truncf %168 : vector<16x128xf32> to vector<16x128xbf16>
    %170 = arith.index_cast %c5_i32 : i32 to index
    %c0_40 = arith.constant 0 : index
    %c0_41 = arith.constant 0 : index
    %171 = vector.load %arg6[%170, %c0_40, %c0_41] : memref<8x16x128xbf16, #tpu.memory_space<vmem>>, vector<1x16x128xbf16>
    %172 = vector.shape_cast %171 : vector<1x16x128xbf16> to vector<16x128xbf16>
    %173 = vector.shape_cast %169 : vector<16x128xbf16> to vector<1x16x128xbf16>
    tpu.vector_store %arg6[%170, %c0_40, %c0_41], %173 {strides = array<i32>} : memref<8x16x128xbf16, #tpu.memory_space<vmem>>, vector<1x16x128xbf16>,
    %c6_i32 = arith.constant 6 : i32
    %174 = arith.index_cast %c6_i32 : i32 to index
    %c0_42 = arith.constant 0 : index
    %c0_43 = arith.constant 0 : index
    %175 = vector.load %arg2[%174, %c0_42, %c0_43] : memref<8x16x512xbf16, #tpu.memory_space<vmem>>, vector<1x16x512xbf16>
    %176 = vector.shape_cast %175 : vector<1x16x512xbf16> to vector<16x512xbf16>
    %177 = arith.extf %176 : vector<16x512xbf16> to vector<16x512xf32>
    %178 = arith.truncf %168 : vector<16x128xf32> to vector<16x128xbf16>
    %cst_44 = arith.constant dense<0.000000e+00> : vector<16x512xf32>
    %179 = tpu.matmul %178, %3, %cst_44 {dimension_numbers = #tpu.dot_dimension_numbers<[1], [0], [0], [1], [0, 0, 1, 1], [], []>} : vector<16x128xbf16>, vector<128x512xbf16>, vector<16x512xf32> -> vector<16x512xf32>
    %180 = arith.addf %177, %179 : vector<16x512xf32>
    %181 = vector.extract_strided_slice %180 {offsets = [0, 0], sizes = [16, 384], strides = [1, 1]} : vector<16x512xf32> to vector<16x384xf32>
    %182 = arith.negf %181 : vector<16x384xf32>
    %183 = math.exp %182 : vector<16x384xf32>
    %cst_45 = arith.constant 1.000000e+00 : f32
    %184 = vector.broadcast %cst_45 : f32 to vector<16x384xf32>
    %185 = arith.addf %184, %183 : vector<16x384xf32>
    %186 = arith.divf %184, %185 : vector<16x384xf32>
    %187 = vector.extract_strided_slice %186 {offsets = [0, 0], sizes = [16, 128], strides = [1, 1]} : vector<16x384xf32> to vector<16x128xf32>
    %188 = vector.extract_strided_slice %186 {offsets = [0, 128], sizes = [16, 128], strides = [1, 1]} : vector<16x384xf32> to vector<16x128xf32>
    %189 = vector.extract_strided_slice %186 {offsets = [0, 256], sizes = [16, 128], strides = [1, 1]} : vector<16x384xf32> to vector<16x128xf32>
    %190 = vector.extract_strided_slice %180 {offsets = [0, 384], sizes = [16, 128], strides = [1, 1]} : vector<16x512xf32> to vector<16x128xf32>
    %191 = math.tanh %190 : vector<16x128xf32>
    %192 = arith.mulf %188, %166 : vector<16x128xf32>
    %193 = arith.mulf %187, %191 : vector<16x128xf32>
    %194 = arith.addf %192, %193 : vector<16x128xf32>
    %195 = math.tanh %194 : vector<16x128xf32>
    %196 = arith.mulf %189, %195 : vector<16x128xf32>
    %197 = arith.truncf %196 : vector<16x128xf32> to vector<16x128xbf16>
    %198 = arith.index_cast %c6_i32 : i32 to index
    %c0_46 = arith.constant 0 : index
    %c0_47 = arith.constant 0 : index
    %199 = vector.load %arg6[%198, %c0_46, %c0_47] : memref<8x16x128xbf16, #tpu.memory_space<vmem>>, vector<1x16x128xbf16>
    %200 = vector.shape_cast %199 : vector<1x16x128xbf16> to vector<16x128xbf16>
    %201 = vector.shape_cast %197 : vector<16x128xbf16> to vector<1x16x128xbf16>
    tpu.vector_store %arg6[%198, %c0_46, %c0_47], %201 {strides = array<i32>} : memref<8x16x128xbf16, #tpu.memory_space<vmem>>, vector<1x16x128xbf16>,
    %c7_i32 = arith.constant 7 : i32
    %202 = arith.index_cast %c7_i32 : i32 to index
    %c0_48 = arith.constant 0 : index
    %c0_49 = arith.constant 0 : index
    %203 = vector.load %arg2[%202, %c0_48, %c0_49] : memref<8x16x512xbf16, #tpu.memory_space<vmem>>, vector<1x16x512xbf16>
    %204 = vector.shape_cast %203 : vector<1x16x512xbf16> to vector<16x512xbf16>
    %205 = arith.extf %204 : vector<16x512xbf16> to vector<16x512xf32>
    %206 = arith.truncf %196 : vector<16x128xf32> to vector<16x128xbf16>
    %cst_50 = arith.constant dense<0.000000e+00> : vector<16x512xf32>
    %207 = tpu.matmul %206, %3, %cst_50 {dimension_numbers = #tpu.dot_dimension_numbers<[1], [0], [0], [1], [0, 0, 1, 1], [], []>} : vector<16x128xbf16>, vector<128x512xbf16>, vector<16x512xf32> -> vector<16x512xf32>
    %208 = arith.addf %205, %207 : vector<16x512xf32>
    %209 = vector.extract_strided_slice %208 {offsets = [0, 0], sizes = [16, 384], strides = [1, 1]} : vector<16x512xf32> to vector<16x384xf32>
    %210 = arith.negf %209 : vector<16x384xf32>
    %211 = math.exp %210 : vector<16x384xf32>
    %cst_51 = arith.constant 1.000000e+00 : f32
    %212 = vector.broadcast %cst_51 : f32 to vector<16x384xf32>
    %213 = arith.addf %212, %211 : vector<16x384xf32>
    %214 = arith.divf %212, %213 : vector<16x384xf32>
    %215 = vector.extract_strided_slice %214 {offsets = [0, 0], sizes = [16, 128], strides = [1, 1]} : vector<16x384xf32> to vector<16x128xf32>
    %216 = vector.extract_strided_slice %214 {offsets = [0, 128], sizes = [16, 128], strides = [1, 1]} : vector<16x384xf32> to vector<16x128xf32>
    %217 = vector.extract_strided_slice %214 {offsets = [0, 256], sizes = [16, 128], strides = [1, 1]} : vector<16x384xf32> to vector<16x128xf32>
    %218 = vector.extract_strided_slice %208 {offsets = [0, 384], sizes = [16, 128], strides = [1, 1]} : vector<16x512xf32> to vector<16x128xf32>
    %219 = math.tanh %218 : vector<16x128xf32>
    %220 = arith.mulf %216, %194 : vector<16x128xf32>
    %221 = arith.mulf %215, %219 : vector<16x128xf32>
    %222 = arith.addf %220, %221 : vector<16x128xf32>
    %223 = math.tanh %222 : vector<16x128xf32>
    %224 = arith.mulf %217, %223 : vector<16x128xf32>
    %225 = arith.truncf %224 : vector<16x128xf32> to vector<16x128xbf16>
    %226 = arith.index_cast %c7_i32 : i32 to index
    %c0_52 = arith.constant 0 : index
    %c0_53 = arith.constant 0 : index
    %227 = vector.load %arg6[%226, %c0_52, %c0_53] : memref<8x16x128xbf16, #tpu.memory_space<vmem>>, vector<1x16x128xbf16>
    %228 = vector.shape_cast %227 : vector<1x16x128xbf16> to vector<16x128xbf16>
    %229 = vector.shape_cast %225 : vector<16x128xbf16> to vector<1x16x128xbf16>
    tpu.vector_store %arg6[%226, %c0_52, %c0_53], %229 {strides = array<i32>} : memref<8x16x128xbf16, #tpu.memory_space<vmem>>, vector<1x16x128xbf16>,
    %c8_i32 = arith.constant 8 : i32
    %c0_54 = arith.constant 0 : index
    %c0_55 = arith.constant 0 : index
    %230 = vector.load %arg9[%c0_54, %c0_55] : memref<16x128xf32, #tpu.memory_space<vmem>>, vector<16x128xf32>
    tpu.vector_store %arg9[%c0_54, %c0_55], %224 {strides = array<i32>} : memref<16x128xf32, #tpu.memory_space<vmem>>, vector<16x128xf32>,
    %c0_56 = arith.constant 0 : index
    %c0_57 = arith.constant 0 : index
    %231 = vector.load %arg10[%c0_56, %c0_57] : memref<16x128xf32, #tpu.memory_space<vmem>>, vector<16x128xf32>
    tpu.vector_store %arg10[%c0_56, %c0_57], %222 {strides = array<i32>} : memref<16x128xf32, #tpu.memory_space<vmem>>, vector<16x128xf32>,
    %c0_i32_58 = arith.constant 0 : i32
    %232 = arith.cmpi eq, %arg1, %c0_i32_58 : i32
    %233 = arith.extui %232 : i1 to i32
    %c0_i32_59 = arith.constant 0 : i32
    %234 = arith.cmpi ne, %233, %c0_i32_59 : i32
    scf.if %234 {
      %c0_60 = arith.constant 0 : index
      %c0_61 = arith.constant 0 : index
      %235 = vector.load %arg9[%c0_60, %c0_61] : memref<16x128xf32, #tpu.memory_space<vmem>>, vector<16x128xf32>
      %c0_62 = arith.constant 0 : index
      %c0_63 = arith.constant 0 : index
      %236 = vector.load %arg7[%c0_62, %c0_63] : memref<16x128xf32, #tpu.memory_space<vmem>>, vector<16x128xf32>
      tpu.vector_store %arg7[%c0_62, %c0_63], %235 {strides = array<i32>} : memref<16x128xf32, #tpu.memory_space<vmem>>, vector<16x128xf32>,
      %c0_64 = arith.constant 0 : index
      %c0_65 = arith.constant 0 : index
      %237 = vector.load %arg10[%c0_64, %c0_65] : memref<16x128xf32, #tpu.memory_space<vmem>>, vector<16x128xf32>
      %c0_66 = arith.constant 0 : index
      %c0_67 = arith.constant 0 : index
      %238 = vector.load %arg8[%c0_66, %c0_67] : memref<16x128xf32, #tpu.memory_space<vmem>>, vector<16x128xf32>
      tpu.vector_store %arg8[%c0_66, %c0_67], %237 {strides = array<i32>} : memref<16x128xf32, #tpu.memory_space<vmem>>, vector<16x128xf32>,
    } else {
    }
    return
  }
  func.func @transform_0(%arg0: i32, %arg1: i32) -> (i32, i32, i32) {
    %c0_i32 = arith.constant 0 : i32
    %c0_i32_0 = arith.constant 0 : i32
    return %arg1, %arg0, %c0_i32 : i32, i32, i32
  }
  func.func @transform_1(%arg0: i32, %arg1: i32) -> (i32, i32) {
    %c0_i32 = arith.constant 0 : i32
    %c0_i32_0 = arith.constant 0 : i32
    return %arg0, %c0_i32 : i32, i32
  }
  func.func @transform_2(%arg0: i32, %arg1: i32) -> (i32, i32) {
    %c0_i32 = arith.constant 0 : i32
    %c0_i32_0 = arith.constant 0 : i32
    return %arg0, %c0_i32 : i32, i32
  }
  func.func @transform_3(%arg0: i32, %arg1: i32) -> (i32, i32) {
    %c0_i32 = arith.constant 0 : i32
    %c0_i32_0 = arith.constant 0 : i32
    %c0_i32_1 = arith.constant 0 : i32
    return %c0_i32, %c0_i32_0 : i32, i32
  }
  func.func @transform_4(%arg0: i32, %arg1: i32) -> (i32, i32, i32) {
    %c0_i32 = arith.constant 0 : i32
    %c0_i32_0 = arith.constant 0 : i32
    return %arg1, %arg0, %c0_i32 : i32, i32, i32
  }
  func.func @transform_5(%arg0: i32, %arg1: i32) -> (i32, i32) {
    %c0_i32 = arith.constant 0 : i32
    %c0_i32_0 = arith.constant 0 : i32
    return %arg0, %c0_i32 : i32, i32
  }
  func.func @transform_6(%arg0: i32, %arg1: i32) -> (i32, i32) {
    %c0_i32 = arith.constant 0 : i32
    %c0_i32_0 = arith.constant 0 : i32
    return %arg0, %c0_i32 : i32, i32
  }
}

</mosaic_0001>

<llo_original>
// kernel: rnn_model_scratch_forward.1
$region0: #{rnn_model_scratch_forward.1}
  #allocation0 [shape = 'u32[]', space=smem, size = 0x4, offset = 0x4, fixed_abs, tag = 'smem constant byte address 0x4 - core index']
  #allocation1 [shape = 'u32[144,128]{1,0:T(1,128)}', space=vmem, size = 0x12000, scoped, tag = 'internal scratch']
  #allocation2 [shape = 'f32[16,128]{1,0:T(8,128)}', space=vmem, size = 0x2000, scoped, tag = 'scratch operand']
  #allocation3 [shape = 'f32[16,128]{1,0:T(8,128)}', space=vmem, size = 0x2000, scoped, tag = 'scratch operand']
  %s0 = inlined_call_operand.vmem [shape: bf16[8,16,512], index: 0, kind: input, shape index: {}]
  %s1 = inlined_call_operand.vmem [shape: f32[16,128], index: 1, kind: input, shape index: {}]
  %s2 = inlined_call_operand.vmem [shape: f32[16,128], index: 2, kind: input, shape index: {}]
  %s3 = inlined_call_operand.vmem [shape: bf16[128,512], index: 3, kind: input, shape index: {}]
  %s4 = inlined_call_operand.vmem [shape: bf16[8,16,128], index: 4, kind: output, shape index: {0}]
  %s5 = inlined_call_operand.vmem [shape: f32[16,128], index: 5, kind: output, shape index: {1}]
  %s6 = inlined_call_operand.vmem [shape: f32[16,128], index: 6, kind: output, shape index: {2}]
  %7 = xla_tuple %s4, %s5, %s6
  %s8 = sld [smem:[#allocation0]]
  $region50: #{rnn_model_scratch_forward.1} parent=0
    _
  %s10 = ssub.s32 1, %s8
  %s11 = scalar_select 0, %s10, %s8
  // Predicated region
  $region2: #{rnn_model_scratch_forward.1} parent=0 // pred_check
    _
  $region3: #{rnn_model_scratch_forward.1} parent=0 // pred_check_branch
    %13 = sbr.rel (0) target = $region5
  $region4: #{rnn_model_scratch_forward.1} parent=0 // pred_region
    _
  $region5: #{rnn_model_scratch_forward.1} parent=0 // pred_fallthru
    _
  // Predicated region
  $region6: #{rnn_model_scratch_forward.1} parent=0 // pred_check
    _
  $region7: #{rnn_model_scratch_forward.1} parent=0 // pred_check_branch
    %15 = sbr.rel (0) target = $region9
  $region8: #{rnn_model_scratch_forward.1} parent=0 // pred_region
    _
  $region9: #{rnn_model_scratch_forward.1} parent=0 // pred_fallthru
    _
  // Predicated region
  $region10: #{rnn_model_scratch_forward.1} parent=0 // pred_check
    _
  $region11: #{rnn_model_scratch_forward.1} parent=0 // pred_check_branch
    %17 = sbr.rel (0) target = $region13
  $region12: #{rnn_model_scratch_forward.1} parent=0 // pred_region
    _
  $region13: #{rnn_model_scratch_forward.1} parent=0 // pred_fallthru
    _
  // Predicated region
  $region14: #{rnn_model_scratch_forward.1} parent=0 // pred_check
    _
  $region15: #{rnn_model_scratch_forward.1} parent=0 // pred_check_branch
    %19 = sbr.rel (0) target = $region17
  $region16: #{rnn_model_scratch_forward.1} parent=0 // pred_region
    _
  $region17: #{rnn_model_scratch_forward.1} parent=0 // pred_fallthru
    _
  %p21 = scmp.eq.s32.totalorder 0, 0
  // Predicated region
  $region18: #{rnn_model_scratch_forward.1} parent=0 // pred_check
    %p22 = pneg %p21
  $region19: #{rnn_model_scratch_forward.1} parent=0 // pred_check_branch
    %24 = sbr.rel (%p22) target = $region21
  $region20: #{rnn_model_scratch_forward.1} parent=0 // pred_region
    %v25 = vld [vmem:[%s1] sm:$0xff]
    %v26 = vld [vmem:[%s1 + $0x8] sm:$0xff]
    %27 = vst [vmem:[#allocation2] sm:$0xff] %v25
    %28 = vst [vmem:[#allocation2 + $0x8] sm:$0xff] %v26
    %v29 = vld [vmem:[%s2] sm:$0xff]
    %v30 = vld [vmem:[%s2 + $0x8] sm:$0xff]
    %31 = vst [vmem:[#allocation3] sm:$0xff] %v29
    %32 = vst [vmem:[#allocation3 + $0x8] sm:$0xff] %v30
  $region21: #{rnn_model_scratch_forward.1} parent=0 // pred_fallthru
    _
  %v33 = vld [vmem:[%s3] sm:$0xff]
  %v34 = vld [vmem:[%s3 + $0x8] sm:$0xff]
  %v35 = vld [vmem:[%s3 + $0x10] sm:$0xff]
  %v36 = vld [vmem:[%s3 + $0x18] sm:$0xff]
  %v37 = vld [vmem:[%s3 + $0x20] sm:$0xff]
  %v38 = vld [vmem:[%s3 + $0x28] sm:$0xff]
  %v39 = vld [vmem:[%s3 + $0x30] sm:$0xff]
  %v40 = vld [vmem:[%s3 + $0x38] sm:$0xff]
  %v41 = vld [vmem:[%s3 + $0x40] sm:$0xff]
  %v42 = vld [vmem:[%s3 + $0x48] sm:$0xff]
  %v43 = vld [vmem:[%s3 + $0x50] sm:$0xff]
  %v44 = vld [vmem:[%s3 + $0x58] sm:$0xff]
  %v45 = vld [vmem:[%s3 + $0x60] sm:$0xff]
  %v46 = vld [vmem:[%s3 + $0x68] sm:$0xff]
  %v47 = vld [vmem:[%s3 + $0x70] sm:$0xff]
  %v48 = vld [vmem:[%s3 + $0x78] sm:$0xff]
  %v49 = vld [vmem:[%s3 + $0x80] sm:$0xff]
  %v50 = vld [vmem:[%s3 + $0x88] sm:$0xff]
  %v51 = vld [vmem:[%s3 + $0x90] sm:$0xff]
  %v52 = vld [vmem:[%s3 + $0x98] sm:$0xff]
  %v53 = vld [vmem:[%s3 + $0xa0] sm:$0xff]
  %v54 = vld [vmem:[%s3 + $0xa8] sm:$0xff]
  %v55 = vld [vmem:[%s3 + $0xb0] sm:$0xff]
  %v56 = vld [vmem:[%s3 + $0xb8] sm:$0xff]
  %v57 = vld [vmem:[%s3 + $0xc0] sm:$0xff]
  %v58 = vld [vmem:[%s3 + $0xc8] sm:$0xff]
  %v59 = vld [vmem:[%s3 + $0xd0] sm:$0xff]
  %v60 = vld [vmem:[%s3 + $0xd8] sm:$0xff]
  %v61 = vld [vmem:[%s3 + $0xe0] sm:$0xff]
  %v62 = vld [vmem:[%s3 + $0xe8] sm:$0xff]
  %v63 = vld [vmem:[%s3 + $0xf0] sm:$0xff]
  %v64 = vld [vmem:[%s3 + $0xf8] sm:$0xff]
  %v65 = vld [vmem:[#allocation2] sm:$0xff]
  %v66 = vld [vmem:[#allocation2 + $0x8] sm:$0xff]
  %v67 = vld [vmem:[#allocation3] sm:$0xff]
  %v68 = vld [vmem:[#allocation3 + $0x8] sm:$0xff]
  %v69 = vld [vmem:[%s0] sm:$0xff]
  %v70 = vld [vmem:[%s0 + $0x8] sm:$0xff]
  %v71 = vld [vmem:[%s0 + $0x10] sm:$0xff]
  %v72 = vld [vmem:[%s0 + $0x18] sm:$0xff]
  %v73 = vunpack.c.l.bf16 %v69
  %v74 = vunpack.c.h.bf16 %v69
  %v75 = vunpack.c.l.bf16 %v70
  %v76 = vunpack.c.h.bf16 %v70
  %v77 = vunpack.c.l.bf16 %v71
  %v78 = vunpack.c.h.bf16 %v71
  %v79 = vunpack.c.l.bf16 %v72
  %v80 = vunpack.c.h.bf16 %v72
  %v81 = vpack.c.bf16 %v66, %v65
  %v114 = vunpack.c.l.b16 %v33
  %v115 = vunpack.c.h.b16 %v33
  %v116 = vunpack.c.l.b16 %v34
  %v117 = vunpack.c.h.b16 %v34
  %v118 = vunpack.c.l.b16 %v35
  %v119 = vunpack.c.h.b16 %v35
  %v120 = vunpack.c.l.b16 %v36
  %v121 = vunpack.c.h.b16 %v36
  %v122 = vunpack.c.l.b16 %v37
  %v123 = vunpack.c.h.b16 %v37
  %v124 = vunpack.c.l.b16 %v38
  %v125 = vunpack.c.h.b16 %v38
  %v126 = vunpack.c.l.b16 %v39
  %v127 = vunpack.c.h.b16 %v39
  %v128 = vunpack.c.l.b16 %v40
  %v129 = vunpack.c.h.b16 %v40
  %v130 = vunpack.c.l.b16 %v41
  %v131 = vunpack.c.h.b16 %v41
  %v132 = vunpack.c.l.b16 %v42
  %v133 = vunpack.c.h.b16 %v42
  %v134 = vunpack.c.l.b16 %v43
  %v135 = vunpack.c.h.b16 %v43
  %v136 = vunpack.c.l.b16 %v44
  %v137 = vunpack.c.h.b16 %v44
  %v138 = vunpack.c.l.b16 %v45
  %v139 = vunpack.c.h.b16 %v45
  %v140 = vunpack.c.l.b16 %v46
  %v141 = vunpack.c.h.b16 %v46
  %v142 = vunpack.c.l.b16 %v47
  %v143 = vunpack.c.h.b16 %v47
  %v144 = vunpack.c.l.b16 %v48
  %v145 = vunpack.c.h.b16 %v48
  %v146 = vunpack.c.l.b16 %v49
  %v147 = vunpack.c.h.b16 %v49
  %v148 = vunpack.c.l.b16 %v50
  %v149 = vunpack.c.h.b16 %v50
  %v150 = vunpack.c.l.b16 %v51
  %v151 = vunpack.c.h.b16 %v51
  %v152 = vunpack.c.l.b16 %v52
  %v153 = vunpack.c.h.b16 %v52
  %v154 = vunpack.c.l.b16 %v53
  %v155 = vunpack.c.h.b16 %v53
  %v156 = vunpack.c.l.b16 %v54
  %v157 = vunpack.c.h.b16 %v54
  %v158 = vunpack.c.l.b16 %v55
  %v159 = vunpack.c.h.b16 %v55
  %v160 = vunpack.c.l.b16 %v56
  %v161 = vunpack.c.h.b16 %v56
  %v162 = vunpack.c.l.b16 %v57
  %v163 = vunpack.c.h.b16 %v57
  %v164 = vunpack.c.l.b16 %v58
  %v165 = vunpack.c.h.b16 %v58
  %v166 = vunpack.c.l.b16 %v59
  %v167 = vunpack.c.h.b16 %v59
  %v168 = vunpack.c.l.b16 %v60
  %v169 = vunpack.c.h.b16 %v60
  %v170 = vunpack.c.l.b16 %v61
  %v171 = vunpack.c.h.b16 %v61
  %v172 = vunpack.c.l.b16 %v62
  %v173 = vunpack.c.h.b16 %v62
  %v174 = vunpack.c.l.b16 %v63
  %v175 = vunpack.c.h.b16 %v63
  %v176 = vunpack.c.l.b16 %v64
  %v177 = vunpack.c.h.b16 %v64
  %v178 = vpack.c.b16 %v118, %v114
  %v179 = vpack.c.b16 %v119, %v115
  %v180 = vpack.c.b16 %v120, %v116
  %v181 = vpack.c.b16 %v121, %v117
  %v182 = vpack.c.b16 %v126, %v122
  %v183 = vpack.c.b16 %v127, %v123
  %v184 = vpack.c.b16 %v128, %v124
  %v185 = vpack.c.b16 %v129, %v125
  %v186 = vpack.c.b16 %v134, %v130
  %v187 = vpack.c.b16 %v135, %v131
  %v188 = vpack.c.b16 %v136, %v132
  %v189 = vpack.c.b16 %v137, %v133
  %v190 = vpack.c.b16 %v142, %v138
  %v191 = vpack.c.b16 %v143, %v139
  %v192 = vpack.c.b16 %v144, %v140
  %v193 = vpack.c.b16 %v145, %v141
  %v194 = vpack.c.b16 %v150, %v146
  %v195 = vpack.c.b16 %v151, %v147
  %v196 = vpack.c.b16 %v152, %v148
  %v197 = vpack.c.b16 %v153, %v149
  %v198 = vpack.c.b16 %v158, %v154
  %v199 = vpack.c.b16 %v159, %v155
  %v200 = vpack.c.b16 %v160, %v156
  %v201 = vpack.c.b16 %v161, %v157
  %v202 = vpack.c.b16 %v166, %v162
  %v203 = vpack.c.b16 %v167, %v163
  %v204 = vpack.c.b16 %v168, %v164
  %v205 = vpack.c.b16 %v169, %v165
  %v206 = vpack.c.b16 %v174, %v170
  %v207 = vpack.c.b16 %v175, %v171
  %v208 = vpack.c.b16 %v176, %v172
  %v209 = vpack.c.b16 %v177, %v173
  %242 = vmatprep.subr.bf16.mxu0 %v207
  %243 = vmatpush1.bf16.msra.mxu0 %v206
  %244 = vmatprep.subr.bf16.mxu0 %v203
  %245 = vmatpush1.bf16.msra.mxu0 %v202
  %246 = vmatprep.subr.bf16.mxu0 %v199
  %247 = vmatpush1.bf16.msra.mxu0 %v198
  %248 = vmatprep.subr.bf16.mxu0 %v195
  %249 = vmatpush1.bf16.msra.mxu0 %v194
  %250 = vmatprep.subr.bf16.mxu0 %v191
  %251 = vmatpush1.bf16.msra.mxu0 %v190
  %252 = vmatprep.subr.bf16.mxu0 %v187
  %253 = vmatpush1.bf16.msra.mxu0 %v186
  %254 = vmatprep.subr.bf16.mxu0 %v183
  %255 = vmatpush1.bf16.msra.mxu0 %v182
  %256 = vmatprep.subr.bf16.mxu0 %v179
  %257 = vmatpush1.bf16.msra.mxu0 %v178
  %258 = vmatprep.subr.bf16.mxu0 0
  %259 = vmatpush2.bf16.msra.mxu0 0
  %260 = vmatprep.subr.bf16.mxu0 0
  %261 = vmatpush2.bf16.msra.mxu0 0
  %262 = vmatprep.subr.bf16.mxu0 0
  %263 = vmatpush2.bf16.msra.mxu0 0
  %264 = vmatprep.subr.bf16.mxu0 0
  %265 = vmatpush2.bf16.msra.mxu0 0
  %266 = vmatprep.subr.bf16.mxu0 0
  %267 = vmatpush2.bf16.msra.mxu0 0
  %268 = vmatprep.subr.bf16.mxu0 0
  %269 = vmatpush2.bf16.msra.mxu0 0
  %270 = vmatprep.subr.bf16.mxu0 0
  %271 = vmatpush2.bf16.msra.mxu0 0
  %272 = vmatprep.subr.bf16.mxu0 0
  %273 = vmatpush2.bf16.msra.mxu0 0
  %274 = vmatprep.mubr.bf16.mxu0 0
  %275 = vmatmul.mubr.bf16.gmra.mxu0 %v81
  %v276 = vpop.f32.mrf.mxu0
  %v277 = vadd.f32 0.0, %v276
  %v278 = vpop.f32.mrf.mxu0
  %v279 = vadd.f32 0.0, %v278
  %v280 = vpop.f32.mrf.mxu0
  %v281 = vadd.f32 0.0, %v280
  %v282 = vpop.f32.mrf.mxu0
  %v283 = vadd.f32 0.0, %v282
  %284 = vdwg.mxu0
  %285 = vmatprep.subr.bf16.mxu0 %v209
  %286 = vmatpush1.bf16.msra.mxu0 %v208
  %287 = vmatprep.subr.bf16.mxu0 %v205
  %288 = vmatpush1.bf16.msra.mxu0 %v204
  %289 = vmatprep.subr.bf16.mxu0 %v201
  %290 = vmatpush1.bf16.msra.mxu0 %v200
  %291 = vmatprep.subr.bf16.mxu0 %v197
  %292 = vmatpush1.bf16.msra.mxu0 %v196
  %293 = vmatprep.subr.bf16.mxu0 %v193
  %294 = vmatpush1.bf16.msra.mxu0 %v192
  %295 = vmatprep.subr.bf16.mxu0 %v189
  %296 = vmatpush1.bf16.msra.mxu0 %v188
  %297 = vmatprep.subr.bf16.mxu0 %v185
  %298 = vmatpush1.bf16.msra.mxu0 %v184
  %299 = vmatprep.subr.bf16.mxu0 %v181
  %300 = vmatpush1.bf16.msra.mxu0 %v180
  %301 = vmatprep.subr.bf16.mxu0 0
  %302 = vmatpush2.bf16.msra.mxu0 0
  %303 = vmatprep.subr.bf16.mxu0 0
  %304 = vmatpush2.bf16.msra.mxu0 0
  %305 = vmatprep.subr.bf16.mxu0 0
  %306 = vmatpush2.bf16.msra.mxu0 0
  %307 = vmatprep.subr.bf16.mxu0 0
  %308 = vmatpush2.bf16.msra.mxu0 0
  %309 = vmatprep.subr.bf16.mxu0 0
  %310 = vmatpush2.bf16.msra.mxu0 0
  %311 = vmatprep.subr.bf16.mxu0 0
  %312 = vmatpush2.bf16.msra.mxu0 0
  %313 = vmatprep.subr.bf16.mxu0 0
  %314 = vmatpush2.bf16.msra.mxu0 0
  %315 = vmatprep.subr.bf16.mxu0 0
  %316 = vmatpush2.bf16.msra.mxu0 0
  %317 = vmatprep.mubr.bf16.mxu0 0
  %318 = vmatmul.mubr.bf16.gmra.mxu0 %v81
  %v319 = vpop.f32.mrf.mxu0
  %v320 = vadd.f32 0.0, %v319
  %v321 = vpop.f32.mrf.mxu0
  %v322 = vadd.f32 0.0, %v321
  %v323 = vpop.f32.mrf.mxu0
  %v324 = vadd.f32 0.0, %v323
  %v325 = vpop.f32.mrf.mxu0
  %v326 = vadd.f32 0.0, %v325
  %327 = vdwg.mxu0
  %v328 = vadd.f32 %v73, %v277
  %v329 = vadd.f32 %v74, %v279
  %v330 = vadd.f32 %v75, %v320
  %v331 = vadd.f32 %v76, %v322
  %v332 = vadd.f32 %v77, %v281
  %v333 = vadd.f32 %v78, %v283
  %v334 = vadd.f32 %v79, %v324
  %v335 = vadd.f32 %v80, %v326
  %v336 = vxor.u32 %v328, 2147483648
  %v337 = vxor.u32 %v329, 2147483648
  %v338 = vxor.u32 %v330, 2147483648
  %v339 = vxor.u32 %v332, 2147483648
  %v340 = vxor.u32 %v333, 2147483648
  %v341 = vxor.u32 %v334, 2147483648
  %v342 = vmul.f32 %v336, 1.442695
  %v343 = vpow.pop %v342
  %v344 = vmul.f32 %v337, 1.442695
  %v345 = vpow.pop %v344
  %v346 = vmul.f32 %v338, 1.442695
  %v347 = vpow.pop %v346
  %v348 = vmul.f32 %v339, 1.442695
  %v349 = vpow.pop %v348
  %v350 = vmul.f32 %v340, 1.442695
  %v351 = vpow.pop %v350
  %v352 = vmul.f32 %v341, 1.442695
  %v353 = vpow.pop %v352
  %v354 = vadd.f32 %v343, 1.0
  %v355 = vadd.f32 %v345, 1.0
  %v356 = vadd.f32 %v347, 1.0
  %v357 = vadd.f32 %v349, 1.0
  %v358 = vadd.f32 %v351, 1.0
  %v359 = vadd.f32 %v353, 1.0
  %v360 = vrcp.pop %v354
  %v361 = vmul.f32 1.0, %v360
  %v362 = vrcp.pop %v355
  %v363 = vmul.f32 1.0, %v362
  %v364 = vrcp.pop %v356
  %v365 = vmul.f32 1.0, %v364
  %v366 = vrcp.pop %v357
  %v367 = vmul.f32 1.0, %v366
  %v368 = vrcp.pop %v358
  %v369 = vmul.f32 1.0, %v368
  %v370 = vrcp.pop %v359
  %v371 = vmul.f32 1.0, %v370
  %v372 = vtanh.pop %v331
  %v373 = vtanh.pop %v335
  %v374 = vmul.f32 %v363, %v67
  %v375 = vmul.f32 %v369, %v68
  %v376 = vmul.f32 %v361, %v372
  %v377 = vmul.f32 %v367, %v373
  %v378 = vadd.f32 %v374, %v376
  %v379 = vadd.f32 %v375, %v377
  %v380 = vtanh.pop %v378
  %v381 = vtanh.pop %v379
  %v382 = vmul.f32 %v365, %v380
  %v383 = vmul.f32 %v371, %v381
  %v384 = vpack.c.bf16 %v383, %v382
  %v386 = vunpack.c.l.b16 %v384
  %v387 = vunpack.c.h.b16 %v384
  %v388 = vpack.c.b16 %v386, %v386
  %v389 = vpack.c.b16 %v387, %v387
  %392 = vst [vmem:[%s4] sm:$0xf] %v388
  %393 = vst [vmem:[%s4 + $0x4] sm:$0xf] %v389
  %s394 = scalar_lea.vmem %s0, 32
  %v395 = vld [vmem:[%s394] sm:$0xff]
  %v396 = vld [vmem:[%s394 + $0x8] sm:$0xff]
  %v397 = vld [vmem:[%s394 + $0x10] sm:$0xff]
  %v398 = vld [vmem:[%s394 + $0x18] sm:$0xff]
  %v399 = vunpack.c.l.bf16 %v395
  %v400 = vunpack.c.h.bf16 %v395
  %v401 = vunpack.c.l.bf16 %v396
  %v402 = vunpack.c.h.bf16 %v396
  %v403 = vunpack.c.l.bf16 %v397
  %v404 = vunpack.c.h.bf16 %v397
  %v405 = vunpack.c.l.bf16 %v398
  %v406 = vunpack.c.h.bf16 %v398
  %407 = vmatprep.subr.bf16.mxu0 %v207
  %408 = vmatpush1.bf16.msra.mxu0 %v206
  %409 = vmatprep.subr.bf16.mxu0 %v203
  %410 = vmatpush1.bf16.msra.mxu0 %v202
  %411 = vmatprep.subr.bf16.mxu0 %v199
  %412 = vmatpush1.bf16.msra.mxu0 %v198
  %413 = vmatprep.subr.bf16.mxu0 %v195
  %414 = vmatpush1.bf16.msra.mxu0 %v194
  %415 = vmatprep.subr.bf16.mxu0 %v191
  %416 = vmatpush1.bf16.msra.mxu0 %v190
  %417 = vmatprep.subr.bf16.mxu0 %v187
  %418 = vmatpush1.bf16.msra.mxu0 %v186
  %419 = vmatprep.subr.bf16.mxu0 %v183
  %420 = vmatpush1.bf16.msra.mxu0 %v182
  %421 = vmatprep.subr.bf16.mxu0 %v179
  %422 = vmatpush1.bf16.msra.mxu0 %v178
  %423 = vmatprep.subr.bf16.mxu0 0
  %424 = vmatpush2.bf16.msra.mxu0 0
  %425 = vmatprep.subr.bf16.mxu0 0
  %426 = vmatpush2.bf16.msra.mxu0 0
  %427 = vmatprep.subr.bf16.mxu0 0
  %428 = vmatpush2.bf16.msra.mxu0 0
  %429 = vmatprep.subr.bf16.mxu0 0
  %430 = vmatpush2.bf16.msra.mxu0 0
  %431 = vmatprep.subr.bf16.mxu0 0
  %432 = vmatpush2.bf16.msra.mxu0 0
  %433 = vmatprep.subr.bf16.mxu0 0
  %434 = vmatpush2.bf16.msra.mxu0 0
  %435 = vmatprep.subr.bf16.mxu0 0
  %436 = vmatpush2.bf16.msra.mxu0 0
  %437 = vmatprep.subr.bf16.mxu0 0
  %438 = vmatpush2.bf16.msra.mxu0 0
  %439 = vmatprep.mubr.bf16.mxu0 0
  %440 = vmatmul.mubr.bf16.gmra.mxu0 %v384
  %v441 = vpop.f32.mrf.mxu0
  %v442 = vadd.f32 0.0, %v441
  %v443 = vpop.f32.mrf.mxu0
  %v444 = vadd.f32 0.0, %v443
  %v445 = vpop.f32.mrf.mxu0
  %v446 = vadd.f32 0.0, %v445
  %v447 = vpop.f32.mrf.mxu0
  %v448 = vadd.f32 0.0, %v447
  %449 = vdwg.mxu0
  %450 = vmatprep.subr.bf16.mxu0 %v209
  %451 = vmatpush1.bf16.msra.mxu0 %v208
  %452 = vmatprep.subr.bf16.mxu0 %v205
  %453 = vmatpush1.bf16.msra.mxu0 %v204
  %454 = vmatprep.subr.bf16.mxu0 %v201
  %455 = vmatpush1.bf16.msra.mxu0 %v200
  %456 = vmatprep.subr.bf16.mxu0 %v197
  %457 = vmatpush1.bf16.msra.mxu0 %v196
  %458 = vmatprep.subr.bf16.mxu0 %v193
  %459 = vmatpush1.bf16.msra.mxu0 %v192
  %460 = vmatprep.subr.bf16.mxu0 %v189
  %461 = vmatpush1.bf16.msra.mxu0 %v188
  %462 = vmatprep.subr.bf16.mxu0 %v185
  %463 = vmatpush1.bf16.msra.mxu0 %v184
  %464 = vmatprep.subr.bf16.mxu0 %v181
  %465 = vmatpush1.bf16.msra.mxu0 %v180
  %466 = vmatprep.subr.bf16.mxu0 0
  %467 = vmatpush2.bf16.msra.mxu0 0
  %468 = vmatprep.subr.bf16.mxu0 0
  %469 = vmatpush2.bf16.msra.mxu0 0
  %470 = vmatprep.subr.bf16.mxu0 0
  %471 = vmatpush2.bf16.msra.mxu0 0
  %472 = vmatprep.subr.bf16.mxu0 0
  %473 = vmatpush2.bf16.msra.mxu0 0
  %474 = vmatprep.subr.bf16.mxu0 0
  %475 = vmatpush2.bf16.msra.mxu0 0
  %476 = vmatprep.subr.bf16.mxu0 0
  %477 = vmatpush2.bf16.msra.mxu0 0
  %478 = vmatprep.subr.bf16.mxu0 0
  %479 = vmatpush2.bf16.msra.mxu0 0
  %480 = vmatprep.subr.bf16.mxu0 0
  %481 = vmatpush2.bf16.msra.mxu0 0
  %482 = vmatprep.mubr.bf16.mxu0 0
  %483 = vmatmul.mubr.bf16.gmra.mxu0 %v384
  %v484 = vpop.f32.mrf.mxu0
  %v485 = vadd.f32 0.0, %v484
  %v486 = vpop.f32.mrf.mxu0
  %v487 = vadd.f32 0.0, %v486
  %v488 = vpop.f32.mrf.mxu0
  %v489 = vadd.f32 0.0, %v488
  %v490 = vpop.f32.mrf.mxu0
  %v491 = vadd.f32 0.0, %v490
  %492 = vdwg.mxu0
  %v493 = vadd.f32 %v399, %v442
  %v494 = vadd.f32 %v400, %v444
  %v495 = vadd.f32 %v401, %v485
  %v496 = vadd.f32 %v402, %v487
  %v497 = vadd.f32 %v403, %v446
  %v498 = vadd.f32 %v404, %v448
  %v499 = vadd.f32 %v405, %v489
  %v500 = vadd.f32 %v406, %v491
  %v501 = vxor.u32 %v493, 2147483648
  %v502 = vxor.u32 %v494, 2147483648
  %v503 = vxor.u32 %v495, 2147483648
  %v504 = vxor.u32 %v497, 2147483648
  %v505 = vxor.u32 %v498, 2147483648
  %v506 = vxor.u32 %v499, 2147483648
  %v507 = vmul.f32 %v501, 1.442695
  %v508 = vpow.pop %v507
  %v509 = vmul.f32 %v502, 1.442695
  %v510 = vpow.pop %v509
  %v511 = vmul.f32 %v503, 1.442695
  %v512 = vpow.pop %v511
  %v513 = vmul.f32 %v504, 1.442695
  %v514 = vpow.pop %v513
  %v515 = vmul.f32 %v505, 1.442695
  %v516 = vpow.pop %v515
  %v517 = vmul.f32 %v506, 1.442695
  %v518 = vpow.pop %v517
  %v519 = vadd.f32 %v508, 1.0
  %v520 = vadd.f32 %v510, 1.0
  %v521 = vadd.f32 %v512, 1.0
  %v522 = vadd.f32 %v514, 1.0
  %v523 = vadd.f32 %v516, 1.0
  %v524 = vadd.f32 %v518, 1.0
  %v525 = vrcp.pop %v519
  %v526 = vmul.f32 1.0, %v525
  %v527 = vrcp.pop %v520
  %v528 = vmul.f32 1.0, %v527
  %v529 = vrcp.pop %v521
  %v530 = vmul.f32 1.0, %v529
  %v531 = vrcp.pop %v522
  %v532 = vmul.f32 1.0, %v531
  %v533 = vrcp.pop %v523
  %v534 = vmul.f32 1.0, %v533
  %v535 = vrcp.pop %v524
  %v536 = vmul.f32 1.0, %v535
  %v537 = vtanh.pop %v496
  %v538 = vtanh.pop %v500
  %v539 = vmul.f32 %v528, %v378
  %v540 = vmul.f32 %v534, %v379
  %v541 = vmul.f32 %v526, %v537
  %v542 = vmul.f32 %v532, %v538
  %v543 = vadd.f32 %v539, %v541
  %v544 = vadd.f32 %v540, %v542
  %v545 = vtanh.pop %v543
  %v546 = vtanh.pop %v544
  %v547 = vmul.f32 %v530, %v545
  %v548 = vmul.f32 %v536, %v546
  %v549 = vpack.c.bf16 %v548, %v547
  %v551 = vunpack.c.l.b16 %v549
  %v552 = vunpack.c.h.b16 %v549
  %v553 = vpack.c.b16 %v551, %v551
  %v554 = vpack.c.b16 %v552, %v552
  %s557 = scalar_lea.vmem %s4, 8
  %558 = vst [vmem:[%s557] sm:$0xf] %v553
  %559 = vst [vmem:[%s557 + $0x4] sm:$0xf] %v554
  %s560 = scalar_lea.vmem %s0, 64
  %v561 = vld [vmem:[%s560] sm:$0xff]
  %v562 = vld [vmem:[%s560 + $0x8] sm:$0xff]
  %v563 = vld [vmem:[%s560 + $0x10] sm:$0xff]
  %v564 = vld [vmem:[%s560 + $0x18] sm:$0xff]
  %v565 = vunpack.c.l.bf16 %v561
  %v566 = vunpack.c.h.bf16 %v561
  %v567 = vunpack.c.l.bf16 %v562
  %v568 = vunpack.c.h.bf16 %v562
  %v569 = vunpack.c.l.bf16 %v563
  %v570 = vunpack.c.h.bf16 %v563
  %v571 = vunpack.c.l.bf16 %v564
  %v572 = vunpack.c.h.bf16 %v564
  %573 = vmatprep.subr.bf16.mxu0 %v207
  %574 = vmatpush1.bf16.msra.mxu0 %v206
  %575 = vmatprep.subr.bf16.mxu0 %v203
  %576 = vmatpush1.bf16.msra.mxu0 %v202
  %577 = vmatprep.subr.bf16.mxu0 %v199
  %578 = vmatpush1.bf16.msra.mxu0 %v198
  %579 = vmatprep.subr.bf16.mxu0 %v195
  %580 = vmatpush1.bf16.msra.mxu0 %v194
  %581 = vmatprep.subr.bf16.mxu0 %v191
  %582 = vmatpush1.bf16.msra.mxu0 %v190
  %583 = vmatprep.subr.bf16.mxu0 %v187
  %584 = vmatpush1.bf16.msra.mxu0 %v186
  %585 = vmatprep.subr.bf16.mxu0 %v183
  %586 = vmatpush1.bf16.msra.mxu0 %v182
  %587 = vmatprep.subr.bf16.mxu0 %v179
  %588 = vmatpush1.bf16.msra.mxu0 %v178
  %589 = vmatprep.subr.bf16.mxu0 0
  %590 = vmatpush2.bf16.msra.mxu0 0
  %591 = vmatprep.subr.bf16.mxu0 0
  %592 = vmatpush2.bf16.msra.mxu0 0
  %593 = vmatprep.subr.bf16.mxu0 0
  %594 = vmatpush2.bf16.msra.mxu0 0
  %595 = vmatprep.subr.bf16.mxu0 0
  %596 = vmatpush2.bf16.msra.mxu0 0
  %597 = vmatprep.subr.bf16.mxu0 0
  %598 = vmatpush2.bf16.msra.mxu0 0
  %599 = vmatprep.subr.bf16.mxu0 0
  %600 = vmatpush2.bf16.msra.mxu0 0
  %601 = vmatprep.subr.bf16.mxu0 0
  %602 = vmatpush2.bf16.msra.mxu0 0
  %603 = vmatprep.subr.bf16.mxu0 0
  %604 = vmatpush2.bf16.msra.mxu0 0
  %605 = vmatprep.mubr.bf16.mxu0 0
  %606 = vmatmul.mubr.bf16.gmra.mxu0 %v549
  %v607 = vpop.f32.mrf.mxu0
  %v608 = vadd.f32 0.0, %v607
  %v609 = vpop.f32.mrf.mxu0
  %v610 = vadd.f32 0.0, %v609
  %v611 = vpop.f32.mrf.mxu0
  %v612 = vadd.f32 0.0, %v611
  %v613 = vpop.f32.mrf.mxu0
  %v614 = vadd.f32 0.0, %v613
  %615 = vdwg.mxu0
  %616 = vmatprep.subr.bf16.mxu0 %v209
  %617 = vmatpush1.bf16.msra.mxu0 %v208
  %618 = vmatprep.subr.bf16.mxu0 %v205
  %619 = vmatpush1.bf16.msra.mxu0 %v204
  %620 = vmatprep.subr.bf16.mxu0 %v201
  %621 = vmatpush1.bf16.msra.mxu0 %v200
  %622 = vmatprep.subr.bf16.mxu0 %v197
  %623 = vmatpush1.bf16.msra.mxu0 %v196
  %624 = vmatprep.subr.bf16.mxu0 %v193
  %625 = vmatpush1.bf16.msra.mxu0 %v192
  %626 = vmatprep.subr.bf16.mxu0 %v189
  %627 = vmatpush1.bf16.msra.mxu0 %v188
  %628 = vmatprep.subr.bf16.mxu0 %v185
  %629 = vmatpush1.bf16.msra.mxu0 %v184
  %630 = vmatprep.subr.bf16.mxu0 %v181
  %631 = vmatpush1.bf16.msra.mxu0 %v180
  %632 = vmatprep.subr.bf16.mxu0 0
  %633 = vmatpush2.bf16.msra.mxu0 0
  %634 = vmatprep.subr.bf16.mxu0 0
  %635 = vmatpush2.bf16.msra.mxu0 0
  %636 = vmatprep.subr.bf16.mxu0 0
  %637 = vmatpush2.bf16.msra.mxu0 0
  %638 = vmatprep.subr.bf16.mxu0 0
  %639 = vmatpush2.bf16.msra.mxu0 0
  %640 = vmatprep.subr.bf16.mxu0 0
  %641 = vmatpush2.bf16.msra.mxu0 0
  %642 = vmatprep.subr.bf16.mxu0 0
  %643 = vmatpush2.bf16.msra.mxu0 0
  %644 = vmatprep.subr.bf16.mxu0 0
  %645 = vmatpush2.bf16.msra.mxu0 0
  %646 = vmatprep.subr.bf16.mxu0 0
  %647 = vmatpush2.bf16.msra.mxu0 0
  %648 = vmatprep.mubr.bf16.mxu0 0
  %649 = vmatmul.mubr.bf16.gmra.mxu0 %v549
  %v650 = vpop.f32.mrf.mxu0
  %v651 = vadd.f32 0.0, %v650
  %v652 = vpop.f32.mrf.mxu0
  %v653 = vadd.f32 0.0, %v652
  %v654 = vpop.f32.mrf.mxu0
  %v655 = vadd.f32 0.0, %v654
  %v656 = vpop.f32.mrf.mxu0
  %v657 = vadd.f32 0.0, %v656
  %658 = vdwg.mxu0
  %v659 = vadd.f32 %v565, %v608
  %v660 = vadd.f32 %v566, %v610
  %v661 = vadd.f32 %v567, %v651
  %v662 = vadd.f32 %v568, %v653
  %v663 = vadd.f32 %v569, %v612
  %v664 = vadd.f32 %v570, %v614
  %v665 = vadd.f32 %v571, %v655
  %v666 = vadd.f32 %v572, %v657
  %v667 = vxor.u32 %v659, 2147483648
  %v668 = vxor.u32 %v660, 2147483648
  %v669 = vxor.u32 %v661, 2147483648
  %v670 = vxor.u32 %v663, 2147483648
  %v671 = vxor.u32 %v664, 2147483648
  %v672 = vxor.u32 %v665, 2147483648
  %v673 = vmul.f32 %v667, 1.442695
  %v674 = vpow.pop %v673
  %v675 = vmul.f32 %v668, 1.442695
  %v676 = vpow.pop %v675
  %v677 = vmul.f32 %v669, 1.442695
  %v678 = vpow.pop %v677
  %v679 = vmul.f32 %v670, 1.442695
  %v680 = vpow.pop %v679
  %v681 = vmul.f32 %v671, 1.442695
  %v682 = vpow.pop %v681
  %v683 = vmul.f32 %v672, 1.442695
  %v684 = vpow.pop %v683
  %v685 = vadd.f32 %v674, 1.0
  %v686 = vadd.f32 %v676, 1.0
  %v687 = vadd.f32 %v678, 1.0
  %v688 = vadd.f32 %v680, 1.0
  %v689 = vadd.f32 %v682, 1.0
  %v690 = vadd.f32 %v684, 1.0
  %v691 = vrcp.pop %v685
  %v692 = vmul.f32 1.0, %v691
  %v693 = vrcp.pop %v686
  %v694 = vmul.f32 1.0, %v693
  %v695 = vrcp.pop %v687
  %v696 = vmul.f32 1.0, %v695
  %v697 = vrcp.pop %v688
  %v698 = vmul.f32 1.0, %v697
  %v699 = vrcp.pop %v689
  %v700 = vmul.f32 1.0, %v699
  %v701 = vrcp.pop %v690
  %v702 = vmul.f32 1.0, %v701
  %v703 = vtanh.pop %v662
  %v704 = vtanh.pop %v666
  %v705 = vmul.f32 %v694, %v543
  %v706 = vmul.f32 %v700, %v544
  %v707 = vmul.f32 %v692, %v703
  %v708 = vmul.f32 %v698, %v704
  %v709 = vadd.f32 %v705, %v707
  %v710 = vadd.f32 %v706, %v708
  %v711 = vtanh.pop %v709
  %v712 = vtanh.pop %v710
  %v713 = vmul.f32 %v696, %v711
  %v714 = vmul.f32 %v702, %v712
  %v715 = vpack.c.bf16 %v714, %v713
  %v717 = vunpack.c.l.b16 %v715
  %v718 = vunpack.c.h.b16 %v715
  %v719 = vpack.c.b16 %v717, %v717
  %v720 = vpack.c.b16 %v718, %v718
  %s723 = scalar_lea.vmem %s4, 16
  %724 = vst [vmem:[%s723] sm:$0xf] %v719
  %725 = vst [vmem:[%s723 + $0x4] sm:$0xf] %v720
  %s726 = scalar_lea.vmem %s0, 96
  %v727 = vld [vmem:[%s726] sm:$0xff]
  %v728 = vld [vmem:[%s726 + $0x8] sm:$0xff]
  %v729 = vld [vmem:[%s726 + $0x10] sm:$0xff]
  %v730 = vld [vmem:[%s726 + $0x18] sm:$0xff]
  %v731 = vunpack.c.l.bf16 %v727
  %v732 = vunpack.c.h.bf16 %v727
  %v733 = vunpack.c.l.bf16 %v728
  %v734 = vunpack.c.h.bf16 %v728
  %v735 = vunpack.c.l.bf16 %v729
  %v736 = vunpack.c.h.bf16 %v729
  %v737 = vunpack.c.l.bf16 %v730
  %v738 = vunpack.c.h.bf16 %v730
  %739 = vmatprep.subr.bf16.mxu0 %v207
  %740 = vmatpush1.bf16.msra.mxu0 %v206
  %741 = vmatprep.subr.bf16.mxu0 %v203
  %742 = vmatpush1.bf16.msra.mxu0 %v202
  %743 = vmatprep.subr.bf16.mxu0 %v199
  %744 = vmatpush1.bf16.msra.mxu0 %v198
  %745 = vmatprep.subr.bf16.mxu0 %v195
  %746 = vmatpush1.bf16.msra.mxu0 %v194
  %747 = vmatprep.subr.bf16.mxu0 %v191
  %748 = vmatpush1.bf16.msra.mxu0 %v190
  %749 = vmatprep.subr.bf16.mxu0 %v187
  %750 = vmatpush1.bf16.msra.mxu0 %v186
  %751 = vmatprep.subr.bf16.mxu0 %v183
  %752 = vmatpush1.bf16.msra.mxu0 %v182
  %753 = vmatprep.subr.bf16.mxu0 %v179
  %754 = vmatpush1.bf16.msra.mxu0 %v178
  %755 = vmatprep.subr.bf16.mxu0 0
  %756 = vmatpush2.bf16.msra.mxu0 0
  %757 = vmatprep.subr.bf16.mxu0 0
  %758 = vmatpush2.bf16.msra.mxu0 0
  %759 = vmatprep.subr.bf16.mxu0 0
  %760 = vmatpush2.bf16.msra.mxu0 0
  %761 = vmatprep.subr.bf16.mxu0 0
  %762 = vmatpush2.bf16.msra.mxu0 0
  %763 = vmatprep.subr.bf16.mxu0 0
  %764 = vmatpush2.bf16.msra.mxu0 0
  %765 = vmatprep.subr.bf16.mxu0 0
  %766 = vmatpush2.bf16.msra.mxu0 0
  %767 = vmatprep.subr.bf16.mxu0 0
  %768 = vmatpush2.bf16.msra.mxu0 0
  %769 = vmatprep.subr.bf16.mxu0 0
  %770 = vmatpush2.bf16.msra.mxu0 0
  %771 = vmatprep.mubr.bf16.mxu0 0
  %772 = vmatmul.mubr.bf16.gmra.mxu0 %v715
  %v773 = vpop.f32.mrf.mxu0
  %v774 = vadd.f32 0.0, %v773
  %v775 = vpop.f32.mrf.mxu0
  %v776 = vadd.f32 0.0, %v775
  %v777 = vpop.f32.mrf.mxu0
  %v778 = vadd.f32 0.0, %v777
  %v779 = vpop.f32.mrf.mxu0
  %v780 = vadd.f32 0.0, %v779
  %781 = vdwg.mxu0
  %782 = vmatprep.subr.bf16.mxu0 %v209
  %783 = vmatpush1.bf16.msra.mxu0 %v208
  %784 = vmatprep.subr.bf16.mxu0 %v205
  %785 = vmatpush1.bf16.msra.mxu0 %v204
  %786 = vmatprep.subr.bf16.mxu0 %v201
  %787 = vmatpush1.bf16.msra.mxu0 %v200
  %788 = vmatprep.subr.bf16.mxu0 %v197
  %789 = vmatpush1.bf16.msra.mxu0 %v196
  %790 = vmatprep.subr.bf16.mxu0 %v193
  %791 = vmatpush1.bf16.msra.mxu0 %v192
  %792 = vmatprep.subr.bf16.mxu0 %v189
  %793 = vmatpush1.bf16.msra.mxu0 %v188
  %794 = vmatprep.subr.bf16.mxu0 %v185
  %795 = vmatpush1.bf16.msra.mxu0 %v184
  %796 = vmatprep.subr.bf16.mxu0 %v181
  %797 = vmatpush1.bf16.msra.mxu0 %v180
  %798 = vmatprep.subr.bf16.mxu0 0
  %799 = vmatpush2.bf16.msra.mxu0 0
  %800 = vmatprep.subr.bf16.mxu0 0
  %801 = vmatpush2.bf16.msra.mxu0 0
  %802 = vmatprep.subr.bf16.mxu0 0
  %803 = vmatpush2.bf16.msra.mxu0 0
  %804 = vmatprep.subr.bf16.mxu0 0
  %805 = vmatpush2.bf16.msra.mxu0 0
  %806 = vmatprep.subr.bf16.mxu0 0
  %807 = vmatpush2.bf16.msra.mxu0 0
  %808 = vmatprep.subr.bf16.mxu0 0
  %809 = vmatpush2.bf16.msra.mxu0 0
  %810 = vmatprep.subr.bf16.mxu0 0
  %811 = vmatpush2.bf16.msra.mxu0 0
  %812 = vmatprep.subr.bf16.mxu0 0
  %813 = vmatpush2.bf16.msra.mxu0 0
  %814 = vmatprep.mubr.bf16.mxu0 0
  %815 = vmatmul.mubr.bf16.gmra.mxu0 %v715
  %v816 = vpop.f32.mrf.mxu0
  %v817 = vadd.f32 0.0, %v816
  %v818 = vpop.f32.mrf.mxu0
  %v819 = vadd.f32 0.0, %v818
  %v820 = vpop.f32.mrf.mxu0
  %v821 = vadd.f32 0.0, %v820
  %v822 = vpop.f32.mrf.mxu0
  %v823 = vadd.f32 0.0, %v822
  %824 = vdwg.mxu0
  %v825 = vadd.f32 %v731, %v774
  %v826 = vadd.f32 %v732, %v776
  %v827 = vadd.f32 %v733, %v817
  %v828 = vadd.f32 %v734, %v819
  %v829 = vadd.f32 %v735, %v778
  %v830 = vadd.f32 %v736, %v780
  %v831 = vadd.f32 %v737, %v821
  %v832 = vadd.f32 %v738, %v823
  %v833 = vxor.u32 %v825, 2147483648
  %v834 = vxor.u32 %v826, 2147483648
  %v835 = vxor.u32 %v827, 2147483648
  %v836 = vxor.u32 %v829, 2147483648
  %v837 = vxor.u32 %v830, 2147483648
  %v838 = vxor.u32 %v831, 2147483648
  %v839 = vmul.f32 %v833, 1.442695
  %v840 = vpow.pop %v839
  %v841 = vmul.f32 %v834, 1.442695
  %v842 = vpow.pop %v841
  %v843 = vmul.f32 %v835, 1.442695
  %v844 = vpow.pop %v843
  %v845 = vmul.f32 %v836, 1.442695
  %v846 = vpow.pop %v845
  %v847 = vmul.f32 %v837, 1.442695
  %v848 = vpow.pop %v847
  %v849 = vmul.f32 %v838, 1.442695
  %v850 = vpow.pop %v849
  %v851 = vadd.f32 %v840, 1.0
  %v852 = vadd.f32 %v842, 1.0
  %v853 = vadd.f32 %v844, 1.0
  %v854 = vadd.f32 %v846, 1.0
  %v855 = vadd.f32 %v848, 1.0
  %v856 = vadd.f32 %v850, 1.0
  %v857 = vrcp.pop %v851
  %v858 = vmul.f32 1.0, %v857
  %v859 = vrcp.pop %v852
  %v860 = vmul.f32 1.0, %v859
  %v861 = vrcp.pop %v853
  %v862 = vmul.f32 1.0, %v861
  %v863 = vrcp.pop %v854
  %v864 = vmul.f32 1.0, %v863
  %v865 = vrcp.pop %v855
  %v866 = vmul.f32 1.0, %v865
  %v867 = vrcp.pop %v856
  %v868 = vmul.f32 1.0, %v867
  %v869 = vtanh.pop %v828
  %v870 = vtanh.pop %v832
  %v871 = vmul.f32 %v860, %v709
  %v872 = vmul.f32 %v866, %v710
  %v873 = vmul.f32 %v858, %v869
  %v874 = vmul.f32 %v864, %v870
  %v875 = vadd.f32 %v871, %v873
  %v876 = vadd.f32 %v872, %v874
  %v877 = vtanh.pop %v875
  %v878 = vtanh.pop %v876
  %v879 = vmul.f32 %v862, %v877
  %v880 = vmul.f32 %v868, %v878
  %v881 = vpack.c.bf16 %v880, %v879
  %v883 = vunpack.c.l.b16 %v881
  %v884 = vunpack.c.h.b16 %v881
  %v885 = vpack.c.b16 %v883, %v883
  %v886 = vpack.c.b16 %v884, %v884
  %s889 = scalar_lea.vmem %s4, 24
  %890 = vst [vmem:[%s889] sm:$0xf] %v885
  %891 = vst [vmem:[%s889 + $0x4] sm:$0xf] %v886
  %s892 = scalar_lea.vmem %s0, 128
  %v893 = vld [vmem:[%s892] sm:$0xff]
  %v894 = vld [vmem:[%s892 + $0x8] sm:$0xff]
  %v895 = vld [vmem:[%s892 + $0x10] sm:$0xff]
  %v896 = vld [vmem:[%s892 + $0x18] sm:$0xff]
  %v897 = vunpack.c.l.bf16 %v893
  %v898 = vunpack.c.h.bf16 %v893
  %v899 = vunpack.c.l.bf16 %v894
  %v900 = vunpack.c.h.bf16 %v894
  %v901 = vunpack.c.l.bf16 %v895
  %v902 = vunpack.c.h.bf16 %v895
  %v903 = vunpack.c.l.bf16 %v896
  %v904 = vunpack.c.h.bf16 %v896
  %905 = vmatprep.subr.bf16.mxu0 %v207
  %906 = vmatpush1.bf16.msra.mxu0 %v206
  %907 = vmatprep.subr.bf16.mxu0 %v203
  %908 = vmatpush1.bf16.msra.mxu0 %v202
  %909 = vmatprep.subr.bf16.mxu0 %v199
  %910 = vmatpush1.bf16.msra.mxu0 %v198
  %911 = vmatprep.subr.bf16.mxu0 %v195
  %912 = vmatpush1.bf16.msra.mxu0 %v194
  %913 = vmatprep.subr.bf16.mxu0 %v191
  %914 = vmatpush1.bf16.msra.mxu0 %v190
  %915 = vmatprep.subr.bf16.mxu0 %v187
  %916 = vmatpush1.bf16.msra.mxu0 %v186
  %917 = vmatprep.subr.bf16.mxu0 %v183
  %918 = vmatpush1.bf16.msra.mxu0 %v182
  %919 = vmatprep.subr.bf16.mxu0 %v179
  %920 = vmatpush1.bf16.msra.mxu0 %v178
  %921 = vmatprep.subr.bf16.mxu0 0
  %922 = vmatpush2.bf16.msra.mxu0 0
  %923 = vmatprep.subr.bf16.mxu0 0
  %924 = vmatpush2.bf16.msra.mxu0 0
  %925 = vmatprep.subr.bf16.mxu0 0
  %926 = vmatpush2.bf16.msra.mxu0 0
  %927 = vmatprep.subr.bf16.mxu0 0
  %928 = vmatpush2.bf16.msra.mxu0 0
  %929 = vmatprep.subr.bf16.mxu0 0
  %930 = vmatpush2.bf16.msra.mxu0 0
  %931 = vmatprep.subr.bf16.mxu0 0
  %932 = vmatpush2.bf16.msra.mxu0 0
  %933 = vmatprep.subr.bf16.mxu0 0
  %934 = vmatpush2.bf16.msra.mxu0 0
  %935 = vmatprep.subr.bf16.mxu0 0
  %936 = vmatpush2.bf16.msra.mxu0 0
  %937 = vmatprep.mubr.bf16.mxu0 0
  %938 = vmatmul.mubr.bf16.gmra.mxu0 %v881
  %v939 = vpop.f32.mrf.mxu0
  %v940 = vadd.f32 0.0, %v939
  %v941 = vpop.f32.mrf.mxu0
  %v942 = vadd.f32 0.0, %v941
  %v943 = vpop.f32.mrf.mxu0
  %v944 = vadd.f32 0.0, %v943
  %v945 = vpop.f32.mrf.mxu0
  %v946 = vadd.f32 0.0, %v945
  %947 = vdwg.mxu0
  %948 = vmatprep.subr.bf16.mxu0 %v209
  %949 = vmatpush1.bf16.msra.mxu0 %v208
  %950 = vmatprep.subr.bf16.mxu0 %v205
  %951 = vmatpush1.bf16.msra.mxu0 %v204
  %952 = vmatprep.subr.bf16.mxu0 %v201
  %953 = vmatpush1.bf16.msra.mxu0 %v200
  %954 = vmatprep.subr.bf16.mxu0 %v197
  %955 = vmatpush1.bf16.msra.mxu0 %v196
  %956 = vmatprep.subr.bf16.mxu0 %v193
  %957 = vmatpush1.bf16.msra.mxu0 %v192
  %958 = vmatprep.subr.bf16.mxu0 %v189
  %959 = vmatpush1.bf16.msra.mxu0 %v188
  %960 = vmatprep.subr.bf16.mxu0 %v185
  %961 = vmatpush1.bf16.msra.mxu0 %v184
  %962 = vmatprep.subr.bf16.mxu0 %v181
  %963 = vmatpush1.bf16.msra.mxu0 %v180
  %964 = vmatprep.subr.bf16.mxu0 0
  %965 = vmatpush2.bf16.msra.mxu0 0
  %966 = vmatprep.subr.bf16.mxu0 0
  %967 = vmatpush2.bf16.msra.mxu0 0
  %968 = vmatprep.subr.bf16.mxu0 0
  %969 = vmatpush2.bf16.msra.mxu0 0
  %970 = vmatprep.subr.bf16.mxu0 0
  %971 = vmatpush2.bf16.msra.mxu0 0
  %972 = vmatprep.subr.bf16.mxu0 0
  %973 = vmatpush2.bf16.msra.mxu0 0
  %974 = vmatprep.subr.bf16.mxu0 0
  %975 = vmatpush2.bf16.msra.mxu0 0
  %976 = vmatprep.subr.bf16.mxu0 0
  %977 = vmatpush2.bf16.msra.mxu0 0
  %978 = vmatprep.subr.bf16.mxu0 0
  %979 = vmatpush2.bf16.msra.mxu0 0
  %980 = vmatprep.mubr.bf16.mxu0 0
  %981 = vmatmul.mubr.bf16.gmra.mxu0 %v881
  %v982 = vpop.f32.mrf.mxu0
  %v983 = vadd.f32 0.0, %v982
  %v984 = vpop.f32.mrf.mxu0
  %v985 = vadd.f32 0.0, %v984
  %v986 = vpop.f32.mrf.mxu0
  %v987 = vadd.f32 0.0, %v986
  %v988 = vpop.f32.mrf.mxu0
  %v989 = vadd.f32 0.0, %v988
  %990 = vdwg.mxu0
  %v991 = vadd.f32 %v897, %v940
  %v992 = vadd.f32 %v898, %v942
  %v993 = vadd.f32 %v899, %v983
  %v994 = vadd.f32 %v900, %v985
  %v995 = vadd.f32 %v901, %v944
  %v996 = vadd.f32 %v902, %v946
  %v997 = vadd.f32 %v903, %v987
  %v998 = vadd.f32 %v904, %v989
  %v999 = vxor.u32 %v991, 2147483648
  %v1000 = vxor.u32 %v992, 2147483648
  %v1001 = vxor.u32 %v993, 2147483648
  %v1002 = vxor.u32 %v995, 2147483648
  %v1003 = vxor.u32 %v996, 2147483648
  %v1004 = vxor.u32 %v997, 2147483648
  %v1005 = vmul.f32 %v999, 1.442695
  %v1006 = vpow.pop %v1005
  %v1007 = vmul.f32 %v1000, 1.442695
  %v1008 = vpow.pop %v1007
  %v1009 = vmul.f32 %v1001, 1.442695
  %v1010 = vpow.pop %v1009
  %v1011 = vmul.f32 %v1002, 1.442695
  %v1012 = vpow.pop %v1011
  %v1013 = vmul.f32 %v1003, 1.442695
  %v1014 = vpow.pop %v1013
  %v1015 = vmul.f32 %v1004, 1.442695
  %v1016 = vpow.pop %v1015
  %v1017 = vadd.f32 %v1006, 1.0
  %v1018 = vadd.f32 %v1008, 1.0
  %v1019 = vadd.f32 %v1010, 1.0
  %v1020 = vadd.f32 %v1012, 1.0
  %v1021 = vadd.f32 %v1014, 1.0
  %v1022 = vadd.f32 %v1016, 1.0
  %v1023 = vrcp.pop %v1017
  %v1024 = vmul.f32 1.0, %v1023
  %v1025 = vrcp.pop %v1018
  %v1026 = vmul.f32 1.0, %v1025
  %v1027 = vrcp.pop %v1019
  %v1028 = vmul.f32 1.0, %v1027
  %v1029 = vrcp.pop %v1020
  %v1030 = vmul.f32 1.0, %v1029
  %v1031 = vrcp.pop %v1021
  %v1032 = vmul.f32 1.0, %v1031
  %v1033 = vrcp.pop %v1022
  %v1034 = vmul.f32 1.0, %v1033
  %v1035 = vtanh.pop %v994
  %v1036 = vtanh.pop %v998
  %v1037 = vmul.f32 %v1026, %v875
  %v1038 = vmul.f32 %v1032, %v876
  %v1039 = vmul.f32 %v1024, %v1035
  %v1040 = vmul.f32 %v1030, %v1036
  %v1041 = vadd.f32 %v1037, %v1039
  %v1042 = vadd.f32 %v1038, %v1040
  %v1043 = vtanh.pop %v1041
  %v1044 = vtanh.pop %v1042
  %v1045 = vmul.f32 %v1028, %v1043
  %v1046 = vmul.f32 %v1034, %v1044
  %v1047 = vpack.c.bf16 %v1046, %v1045
  %v1049 = vunpack.c.l.b16 %v1047
  %v1050 = vunpack.c.h.b16 %v1047
  %v1051 = vpack.c.b16 %v1049, %v1049
  %v1052 = vpack.c.b16 %v1050, %v1050
  %s1055 = scalar_lea.vmem %s4, 32
  %1056 = vst [vmem:[%s1055] sm:$0xf] %v1051
  %1057 = vst [vmem:[%s1055 + $0x4] sm:$0xf] %v1052
  %s1058 = scalar_lea.vmem %s0, 160
  %v1059 = vld [vmem:[%s1058] sm:$0xff]
  %v1060 = vld [vmem:[%s1058 + $0x8] sm:$0xff]
  %v1061 = vld [vmem:[%s1058 + $0x10] sm:$0xff]
  %v1062 = vld [vmem:[%s1058 + $0x18] sm:$0xff]
  %v1063 = vunpack.c.l.bf16 %v1059
  %v1064 = vunpack.c.h.bf16 %v1059
  %v1065 = vunpack.c.l.bf16 %v1060
  %v1066 = vunpack.c.h.bf16 %v1060
  %v1067 = vunpack.c.l.bf16 %v1061
  %v1068 = vunpack.c.h.bf16 %v1061
  %v1069 = vunpack.c.l.bf16 %v1062
  %v1070 = vunpack.c.h.bf16 %v1062
  %1071 = vmatprep.subr.bf16.mxu0 %v207
  %1072 = vmatpush1.bf16.msra.mxu0 %v206
  %1073 = vmatprep.subr.bf16.mxu0 %v203
  %1074 = vmatpush1.bf16.msra.mxu0 %v202
  %1075 = vmatprep.subr.bf16.mxu0 %v199
  %1076 = vmatpush1.bf16.msra.mxu0 %v198
  %1077 = vmatprep.subr.bf16.mxu0 %v195
  %1078 = vmatpush1.bf16.msra.mxu0 %v194
  %1079 = vmatprep.subr.bf16.mxu0 %v191
  %1080 = vmatpush1.bf16.msra.mxu0 %v190
  %1081 = vmatprep.subr.bf16.mxu0 %v187
  %1082 = vmatpush1.bf16.msra.mxu0 %v186
  %1083 = vmatprep.subr.bf16.mxu0 %v183
  %1084 = vmatpush1.bf16.msra.mxu0 %v182
  %1085 = vmatprep.subr.bf16.mxu0 %v179
  %1086 = vmatpush1.bf16.msra.mxu0 %v178
  %1087 = vmatprep.subr.bf16.mxu0 0
  %1088 = vmatpush2.bf16.msra.mxu0 0
  %1089 = vmatprep.subr.bf16.mxu0 0
  %1090 = vmatpush2.bf16.msra.mxu0 0
  %1091 = vmatprep.subr.bf16.mxu0 0
  %1092 = vmatpush2.bf16.msra.mxu0 0
  %1093 = vmatprep.subr.bf16.mxu0 0
  %1094 = vmatpush2.bf16.msra.mxu0 0
  %1095 = vmatprep.subr.bf16.mxu0 0
  %1096 = vmatpush2.bf16.msra.mxu0 0
  %1097 = vmatprep.subr.bf16.mxu0 0
  %1098 = vmatpush2.bf16.msra.mxu0 0
  %1099 = vmatprep.subr.bf16.mxu0 0
  %1100 = vmatpush2.bf16.msra.mxu0 0
  %1101 = vmatprep.subr.bf16.mxu0 0
  %1102 = vmatpush2.bf16.msra.mxu0 0
  %1103 = vmatprep.mubr.bf16.mxu0 0
  %1104 = vmatmul.mubr.bf16.gmra.mxu0 %v1047
  %v1105 = vpop.f32.mrf.mxu0
  %v1106 = vadd.f32 0.0, %v1105
  %v1107 = vpop.f32.mrf.mxu0
  %v1108 = vadd.f32 0.0, %v1107
  %v1109 = vpop.f32.mrf.mxu0
  %v1110 = vadd.f32 0.0, %v1109
  %v1111 = vpop.f32.mrf.mxu0
  %v1112 = vadd.f32 0.0, %v1111
  %1113 = vdwg.mxu0
  %1114 = vmatprep.subr.bf16.mxu0 %v209
  %1115 = vmatpush1.bf16.msra.mxu0 %v208
  %1116 = vmatprep.subr.bf16.mxu0 %v205
  %1117 = vmatpush1.bf16.msra.mxu0 %v204
  %1118 = vmatprep.subr.bf16.mxu0 %v201
  %1119 = vmatpush1.bf16.msra.mxu0 %v200
  %1120 = vmatprep.subr.bf16.mxu0 %v197
  %1121 = vmatpush1.bf16.msra.mxu0 %v196
  %1122 = vmatprep.subr.bf16.mxu0 %v193
  %1123 = vmatpush1.bf16.msra.mxu0 %v192
  %1124 = vmatprep.subr.bf16.mxu0 %v189
  %1125 = vmatpush1.bf16.msra.mxu0 %v188
  %1126 = vmatprep.subr.bf16.mxu0 %v185
  %1127 = vmatpush1.bf16.msra.mxu0 %v184
  %1128 = vmatprep.subr.bf16.mxu0 %v181
  %1129 = vmatpush1.bf16.msra.mxu0 %v180
  %1130 = vmatprep.subr.bf16.mxu0 0
  %1131 = vmatpush2.bf16.msra.mxu0 0
  %1132 = vmatprep.subr.bf16.mxu0 0
  %1133 = vmatpush2.bf16.msra.mxu0 0
  %1134 = vmatprep.subr.bf16.mxu0 0
  %1135 = vmatpush2.bf16.msra.mxu0 0
  %1136 = vmatprep.subr.bf16.mxu0 0
  %1137 = vmatpush2.bf16.msra.mxu0 0
  %1138 = vmatprep.subr.bf16.mxu0 0
  %1139 = vmatpush2.bf16.msra.mxu0 0
  %1140 = vmatprep.subr.bf16.mxu0 0
  %1141 = vmatpush2.bf16.msra.mxu0 0
  %1142 = vmatprep.subr.bf16.mxu0 0
  %1143 = vmatpush2.bf16.msra.mxu0 0
  %1144 = vmatprep.subr.bf16.mxu0 0
  %1145 = vmatpush2.bf16.msra.mxu0 0
  %1146 = vmatprep.mubr.bf16.mxu0 0
  %1147 = vmatmul.mubr.bf16.gmra.mxu0 %v1047
  %v1148 = vpop.f32.mrf.mxu0
  %v1149 = vadd.f32 0.0, %v1148
  %v1150 = vpop.f32.mrf.mxu0
  %v1151 = vadd.f32 0.0, %v1150
  %v1152 = vpop.f32.mrf.mxu0
  %v1153 = vadd.f32 0.0, %v1152
  %v1154 = vpop.f32.mrf.mxu0
  %v1155 = vadd.f32 0.0, %v1154
  %1156 = vdwg.mxu0
  %v1157 = vadd.f32 %v1063, %v1106
  %v1158 = vadd.f32 %v1064, %v1108
  %v1159 = vadd.f32 %v1065, %v1149
  %v1160 = vadd.f32 %v1066, %v1151
  %v1161 = vadd.f32 %v1067, %v1110
  %v1162 = vadd.f32 %v1068, %v1112
  %v1163 = vadd.f32 %v1069, %v1153
  %v1164 = vadd.f32 %v1070, %v1155
  %v1165 = vxor.u32 %v1157, 2147483648
  %v1166 = vxor.u32 %v1158, 2147483648
  %v1167 = vxor.u32 %v1159, 2147483648
  %v1168 = vxor.u32 %v1161, 2147483648
  %v1169 = vxor.u32 %v1162, 2147483648
  %v1170 = vxor.u32 %v1163, 2147483648
  %v1171 = vmul.f32 %v1165, 1.442695
  %v1172 = vpow.pop %v1171
  %v1173 = vmul.f32 %v1166, 1.442695
  %v1174 = vpow.pop %v1173
  %v1175 = vmul.f32 %v1167, 1.442695
  %v1176 = vpow.pop %v1175
  %v1177 = vmul.f32 %v1168, 1.442695
  %v1178 = vpow.pop %v1177
  %v1179 = vmul.f32 %v1169, 1.442695
  %v1180 = vpow.pop %v1179
  %v1181 = vmul.f32 %v1170, 1.442695
  %v1182 = vpow.pop %v1181
  %v1183 = vadd.f32 %v1172, 1.0
  %v1184 = vadd.f32 %v1174, 1.0
  %v1185 = vadd.f32 %v1176, 1.0
  %v1186 = vadd.f32 %v1178, 1.0
  %v1187 = vadd.f32 %v1180, 1.0
  %v1188 = vadd.f32 %v1182, 1.0
  %v1189 = vrcp.pop %v1183
  %v1190 = vmul.f32 1.0, %v1189
  %v1191 = vrcp.pop %v1184
  %v1192 = vmul.f32 1.0, %v1191
  %v1193 = vrcp.pop %v1185
  %v1194 = vmul.f32 1.0, %v1193
  %v1195 = vrcp.pop %v1186
  %v1196 = vmul.f32 1.0, %v1195
  %v1197 = vrcp.pop %v1187
  %v1198 = vmul.f32 1.0, %v1197
  %v1199 = vrcp.pop %v1188
  %v1200 = vmul.f32 1.0, %v1199
  %v1201 = vtanh.pop %v1160
  %v1202 = vtanh.pop %v1164
  %v1203 = vmul.f32 %v1192, %v1041
  %v1204 = vmul.f32 %v1198, %v1042
  %v1205 = vmul.f32 %v1190, %v1201
  %v1206 = vmul.f32 %v1196, %v1202
  %v1207 = vadd.f32 %v1203, %v1205
  %v1208 = vadd.f32 %v1204, %v1206
  %v1209 = vtanh.pop %v1207
  %v1210 = vtanh.pop %v1208
  %v1211 = vmul.f32 %v1194, %v1209
  %v1212 = vmul.f32 %v1200, %v1210
  %v1213 = vpack.c.bf16 %v1212, %v1211
  %v1215 = vunpack.c.l.b16 %v1213
  %v1216 = vunpack.c.h.b16 %v1213
  %v1217 = vpack.c.b16 %v1215, %v1215
  %v1218 = vpack.c.b16 %v1216, %v1216
  %s1221 = scalar_lea.vmem %s4, 40
  %1222 = vst [vmem:[%s1221] sm:$0xf] %v1217
  %1223 = vst [vmem:[%s1221 + $0x4] sm:$0xf] %v1218
  %s1224 = scalar_lea.vmem %s0, 192
  %v1225 = vld [vmem:[%s1224] sm:$0xff]
  %v1226 = vld [vmem:[%s1224 + $0x8] sm:$0xff]
  %v1227 = vld [vmem:[%s1224 + $0x10] sm:$0xff]
  %v1228 = vld [vmem:[%s1224 + $0x18] sm:$0xff]
  %v1229 = vunpack.c.l.bf16 %v1225
  %v1230 = vunpack.c.h.bf16 %v1225
  %v1231 = vunpack.c.l.bf16 %v1226
  %v1232 = vunpack.c.h.bf16 %v1226
  %v1233 = vunpack.c.l.bf16 %v1227
  %v1234 = vunpack.c.h.bf16 %v1227
  %v1235 = vunpack.c.l.bf16 %v1228
  %v1236 = vunpack.c.h.bf16 %v1228
  %1237 = vmatprep.subr.bf16.mxu0 %v207
  %1238 = vmatpush1.bf16.msra.mxu0 %v206
  %1239 = vmatprep.subr.bf16.mxu0 %v203
  %1240 = vmatpush1.bf16.msra.mxu0 %v202
  %1241 = vmatprep.subr.bf16.mxu0 %v199
  %1242 = vmatpush1.bf16.msra.mxu0 %v198
  %1243 = vmatprep.subr.bf16.mxu0 %v195
  %1244 = vmatpush1.bf16.msra.mxu0 %v194
  %1245 = vmatprep.subr.bf16.mxu0 %v191
  %1246 = vmatpush1.bf16.msra.mxu0 %v190
  %1247 = vmatprep.subr.bf16.mxu0 %v187
  %1248 = vmatpush1.bf16.msra.mxu0 %v186
  %1249 = vmatprep.subr.bf16.mxu0 %v183
  %1250 = vmatpush1.bf16.msra.mxu0 %v182
  %1251 = vmatprep.subr.bf16.mxu0 %v179
  %1252 = vmatpush1.bf16.msra.mxu0 %v178
  %1253 = vmatprep.subr.bf16.mxu0 0
  %1254 = vmatpush2.bf16.msra.mxu0 0
  %1255 = vmatprep.subr.bf16.mxu0 0
  %1256 = vmatpush2.bf16.msra.mxu0 0
  %1257 = vmatprep.subr.bf16.mxu0 0
  %1258 = vmatpush2.bf16.msra.mxu0 0
  %1259 = vmatprep.subr.bf16.mxu0 0
  %1260 = vmatpush2.bf16.msra.mxu0 0
  %1261 = vmatprep.subr.bf16.mxu0 0
  %1262 = vmatpush2.bf16.msra.mxu0 0
  %1263 = vmatprep.subr.bf16.mxu0 0
  %1264 = vmatpush2.bf16.msra.mxu0 0
  %1265 = vmatprep.subr.bf16.mxu0 0
  %1266 = vmatpush2.bf16.msra.mxu0 0
  %1267 = vmatprep.subr.bf16.mxu0 0
  %1268 = vmatpush2.bf16.msra.mxu0 0
  %1269 = vmatprep.mubr.bf16.mxu0 0
  %1270 = vmatmul.mubr.bf16.gmra.mxu0 %v1213
  %v1271 = vpop.f32.mrf.mxu0
  %v1272 = vadd.f32 0.0, %v1271
  %v1273 = vpop.f32.mrf.mxu0
  %v1274 = vadd.f32 0.0, %v1273
  %v1275 = vpop.f32.mrf.mxu0
  %v1276 = vadd.f32 0.0, %v1275
  %v1277 = vpop.f32.mrf.mxu0
  %v1278 = vadd.f32 0.0, %v1277
  %1279 = vdwg.mxu0
  %1280 = vmatprep.subr.bf16.mxu0 %v209
  %1281 = vmatpush1.bf16.msra.mxu0 %v208
  %1282 = vmatprep.subr.bf16.mxu0 %v205
  %1283 = vmatpush1.bf16.msra.mxu0 %v204
  %1284 = vmatprep.subr.bf16.mxu0 %v201
  %1285 = vmatpush1.bf16.msra.mxu0 %v200
  %1286 = vmatprep.subr.bf16.mxu0 %v197
  %1287 = vmatpush1.bf16.msra.mxu0 %v196
  %1288 = vmatprep.subr.bf16.mxu0 %v193
  %1289 = vmatpush1.bf16.msra.mxu0 %v192
  %1290 = vmatprep.subr.bf16.mxu0 %v189
  %1291 = vmatpush1.bf16.msra.mxu0 %v188
  %1292 = vmatprep.subr.bf16.mxu0 %v185
  %1293 = vmatpush1.bf16.msra.mxu0 %v184
  %1294 = vmatprep.subr.bf16.mxu0 %v181
  %1295 = vmatpush1.bf16.msra.mxu0 %v180
  %1296 = vmatprep.subr.bf16.mxu0 0
  %1297 = vmatpush2.bf16.msra.mxu0 0
  %1298 = vmatprep.subr.bf16.mxu0 0
  %1299 = vmatpush2.bf16.msra.mxu0 0
  %1300 = vmatprep.subr.bf16.mxu0 0
  %1301 = vmatpush2.bf16.msra.mxu0 0
  %1302 = vmatprep.subr.bf16.mxu0 0
  %1303 = vmatpush2.bf16.msra.mxu0 0
  %1304 = vmatprep.subr.bf16.mxu0 0
  %1305 = vmatpush2.bf16.msra.mxu0 0
  %1306 = vmatprep.subr.bf16.mxu0 0
  %1307 = vmatpush2.bf16.msra.mxu0 0
  %1308 = vmatprep.subr.bf16.mxu0 0
  %1309 = vmatpush2.bf16.msra.mxu0 0
  %1310 = vmatprep.subr.bf16.mxu0 0
  %1311 = vmatpush2.bf16.msra.mxu0 0
  %1312 = vmatprep.mubr.bf16.mxu0 0
  %1313 = vmatmul.mubr.bf16.gmra.mxu0 %v1213
  %v1314 = vpop.f32.mrf.mxu0
  %v1315 = vadd.f32 0.0, %v1314
  %v1316 = vpop.f32.mrf.mxu0
  %v1317 = vadd.f32 0.0, %v1316
  %v1318 = vpop.f32.mrf.mxu0
  %v1319 = vadd.f32 0.0, %v1318
  %v1320 = vpop.f32.mrf.mxu0
  %v1321 = vadd.f32 0.0, %v1320
  %1322 = vdwg.mxu0
  %v1323 = vadd.f32 %v1229, %v1272
  %v1324 = vadd.f32 %v1230, %v1274
  %v1325 = vadd.f32 %v1231, %v1315
  %v1326 = vadd.f32 %v1232, %v1317
  %v1327 = vadd.f32 %v1233, %v1276
  %v1328 = vadd.f32 %v1234, %v1278
  %v1329 = vadd.f32 %v1235, %v1319
  %v1330 = vadd.f32 %v1236, %v1321
  %v1331 = vxor.u32 %v1323, 2147483648
  %v1332 = vxor.u32 %v1324, 2147483648
  %v1333 = vxor.u32 %v1325, 2147483648
  %v1334 = vxor.u32 %v1327, 2147483648
  %v1335 = vxor.u32 %v1328, 2147483648
  %v1336 = vxor.u32 %v1329, 2147483648
  %v1337 = vmul.f32 %v1331, 1.442695
  %v1338 = vpow.pop %v1337
  %v1339 = vmul.f32 %v1332, 1.442695
  %v1340 = vpow.pop %v1339
  %v1341 = vmul.f32 %v1333, 1.442695
  %v1342 = vpow.pop %v1341
  %v1343 = vmul.f32 %v1334, 1.442695
  %v1344 = vpow.pop %v1343
  %v1345 = vmul.f32 %v1335, 1.442695
  %v1346 = vpow.pop %v1345
  %v1347 = vmul.f32 %v1336, 1.442695
  %v1348 = vpow.pop %v1347
  %v1349 = vadd.f32 %v1338, 1.0
  %v1350 = vadd.f32 %v1340, 1.0
  %v1351 = vadd.f32 %v1342, 1.0
  %v1352 = vadd.f32 %v1344, 1.0
  %v1353 = vadd.f32 %v1346, 1.0
  %v1354 = vadd.f32 %v1348, 1.0
  %v1355 = vrcp.pop %v1349
  %v1356 = vmul.f32 1.0, %v1355
  %v1357 = vrcp.pop %v1350
  %v1358 = vmul.f32 1.0, %v1357
  %v1359 = vrcp.pop %v1351
  %v1360 = vmul.f32 1.0, %v1359
  %v1361 = vrcp.pop %v1352
  %v1362 = vmul.f32 1.0, %v1361
  %v1363 = vrcp.pop %v1353
  %v1364 = vmul.f32 1.0, %v1363
  %v1365 = vrcp.pop %v1354
  %v1366 = vmul.f32 1.0, %v1365
  %v1367 = vtanh.pop %v1326
  %v1368 = vtanh.pop %v1330
  %v1369 = vmul.f32 %v1358, %v1207
  %v1370 = vmul.f32 %v1364, %v1208
  %v1371 = vmul.f32 %v1356, %v1367
  %v1372 = vmul.f32 %v1362, %v1368
  %v1373 = vadd.f32 %v1369, %v1371
  %v1374 = vadd.f32 %v1370, %v1372
  %v1375 = vtanh.pop %v1373
  %v1376 = vtanh.pop %v1374
  %v1377 = vmul.f32 %v1360, %v1375
  %v1378 = vmul.f32 %v1366, %v1376
  %v1379 = vpack.c.bf16 %v1378, %v1377
  %v1381 = vunpack.c.l.b16 %v1379
  %v1382 = vunpack.c.h.b16 %v1379
  %v1383 = vpack.c.b16 %v1381, %v1381
  %v1384 = vpack.c.b16 %v1382, %v1382
  %s1387 = scalar_lea.vmem %s4, 48
  %1388 = vst [vmem:[%s1387] sm:$0xf] %v1383
  %1389 = vst [vmem:[%s1387 + $0x4] sm:$0xf] %v1384
  %s1390 = scalar_lea.vmem %s0, 224
  %v1391 = vld [vmem:[%s1390] sm:$0xff]
  %v1392 = vld [vmem:[%s1390 + $0x8] sm:$0xff]
  %v1393 = vld [vmem:[%s1390 + $0x10] sm:$0xff]
  %v1394 = vld [vmem:[%s1390 + $0x18] sm:$0xff]
  %v1395 = vunpack.c.l.bf16 %v1391
  %v1396 = vunpack.c.h.bf16 %v1391
  %v1397 = vunpack.c.l.bf16 %v1392
  %v1398 = vunpack.c.h.bf16 %v1392
  %v1399 = vunpack.c.l.bf16 %v1393
  %v1400 = vunpack.c.h.bf16 %v1393
  %v1401 = vunpack.c.l.bf16 %v1394
  %v1402 = vunpack.c.h.bf16 %v1394
  %1403 = vmatprep.subr.bf16.mxu0 %v207
  %1404 = vmatpush1.bf16.msra.mxu0 %v206
  %1405 = vmatprep.subr.bf16.mxu0 %v203
  %1406 = vmatpush1.bf16.msra.mxu0 %v202
  %1407 = vmatprep.subr.bf16.mxu0 %v199
  %1408 = vmatpush1.bf16.msra.mxu0 %v198
  %1409 = vmatprep.subr.bf16.mxu0 %v195
  %1410 = vmatpush1.bf16.msra.mxu0 %v194
  %1411 = vmatprep.subr.bf16.mxu0 %v191
  %1412 = vmatpush1.bf16.msra.mxu0 %v190
  %1413 = vmatprep.subr.bf16.mxu0 %v187
  %1414 = vmatpush1.bf16.msra.mxu0 %v186
  %1415 = vmatprep.subr.bf16.mxu0 %v183
  %1416 = vmatpush1.bf16.msra.mxu0 %v182
  %1417 = vmatprep.subr.bf16.mxu0 %v179
  %1418 = vmatpush1.bf16.msra.mxu0 %v178
  %1419 = vmatprep.subr.bf16.mxu0 0
  %1420 = vmatpush2.bf16.msra.mxu0 0
  %1421 = vmatprep.subr.bf16.mxu0 0
  %1422 = vmatpush2.bf16.msra.mxu0 0
  %1423 = vmatprep.subr.bf16.mxu0 0
  %1424 = vmatpush2.bf16.msra.mxu0 0
  %1425 = vmatprep.subr.bf16.mxu0 0
  %1426 = vmatpush2.bf16.msra.mxu0 0
  %1427 = vmatprep.subr.bf16.mxu0 0
  %1428 = vmatpush2.bf16.msra.mxu0 0
  %1429 = vmatprep.subr.bf16.mxu0 0
  %1430 = vmatpush2.bf16.msra.mxu0 0
  %1431 = vmatprep.subr.bf16.mxu0 0
  %1432 = vmatpush2.bf16.msra.mxu0 0
  %1433 = vmatprep.subr.bf16.mxu0 0
  %1434 = vmatpush2.bf16.msra.mxu0 0
  %1435 = vmatprep.mubr.bf16.mxu0 0
  %1436 = vmatmul.mubr.bf16.gmra.mxu0 %v1379
  %v1437 = vpop.f32.mrf.mxu0
  %v1438 = vadd.f32 0.0, %v1437
  %v1439 = vpop.f32.mrf.mxu0
  %v1440 = vadd.f32 0.0, %v1439
  %v1441 = vpop.f32.mrf.mxu0
  %v1442 = vadd.f32 0.0, %v1441
  %v1443 = vpop.f32.mrf.mxu0
  %v1444 = vadd.f32 0.0, %v1443
  %1445 = vdwg.mxu0
  %1446 = vmatprep.subr.bf16.mxu0 %v209
  %1447 = vmatpush1.bf16.msra.mxu0 %v208
  %1448 = vmatprep.subr.bf16.mxu0 %v205
  %1449 = vmatpush1.bf16.msra.mxu0 %v204
  %1450 = vmatprep.subr.bf16.mxu0 %v201
  %1451 = vmatpush1.bf16.msra.mxu0 %v200
  %1452 = vmatprep.subr.bf16.mxu0 %v197
  %1453 = vmatpush1.bf16.msra.mxu0 %v196
  %1454 = vmatprep.subr.bf16.mxu0 %v193
  %1455 = vmatpush1.bf16.msra.mxu0 %v192
  %1456 = vmatprep.subr.bf16.mxu0 %v189
  %1457 = vmatpush1.bf16.msra.mxu0 %v188
  %1458 = vmatprep.subr.bf16.mxu0 %v185
  %1459 = vmatpush1.bf16.msra.mxu0 %v184
  %1460 = vmatprep.subr.bf16.mxu0 %v181
  %1461 = vmatpush1.bf16.msra.mxu0 %v180
  %1462 = vmatprep.subr.bf16.mxu0 0
  %1463 = vmatpush2.bf16.msra.mxu0 0
  %1464 = vmatprep.subr.bf16.mxu0 0
  %1465 = vmatpush2.bf16.msra.mxu0 0
  %1466 = vmatprep.subr.bf16.mxu0 0
  %1467 = vmatpush2.bf16.msra.mxu0 0
  %1468 = vmatprep.subr.bf16.mxu0 0
  %1469 = vmatpush2.bf16.msra.mxu0 0
  %1470 = vmatprep.subr.bf16.mxu0 0
  %1471 = vmatpush2.bf16.msra.mxu0 0
  %1472 = vmatprep.subr.bf16.mxu0 0
  %1473 = vmatpush2.bf16.msra.mxu0 0
  %1474 = vmatprep.subr.bf16.mxu0 0
  %1475 = vmatpush2.bf16.msra.mxu0 0
  %1476 = vmatprep.subr.bf16.mxu0 0
  %1477 = vmatpush2.bf16.msra.mxu0 0
  %1478 = vmatprep.mubr.bf16.mxu0 0
  %1479 = vmatmul.mubr.bf16.gmra.mxu0 %v1379
  %v1480 = vpop.f32.mrf.mxu0
  %v1481 = vadd.f32 0.0, %v1480
  %v1482 = vpop.f32.mrf.mxu0
  %v1483 = vadd.f32 0.0, %v1482
  %v1484 = vpop.f32.mrf.mxu0
  %v1485 = vadd.f32 0.0, %v1484
  %v1486 = vpop.f32.mrf.mxu0
  %v1487 = vadd.f32 0.0, %v1486
  %1488 = vdwg.mxu0
  %v1489 = vadd.f32 %v1395, %v1438
  %v1490 = vadd.f32 %v1396, %v1440
  %v1491 = vadd.f32 %v1397, %v1481
  %v1492 = vadd.f32 %v1398, %v1483
  %v1493 = vadd.f32 %v1399, %v1442
  %v1494 = vadd.f32 %v1400, %v1444
  %v1495 = vadd.f32 %v1401, %v1485
  %v1496 = vadd.f32 %v1402, %v1487
  %v1497 = vxor.u32 %v1489, 2147483648
  %v1498 = vxor.u32 %v1490, 2147483648
  %v1499 = vxor.u32 %v1491, 2147483648
  %v1500 = vxor.u32 %v1493, 2147483648
  %v1501 = vxor.u32 %v1494, 2147483648
  %v1502 = vxor.u32 %v1495, 2147483648
  %v1503 = vmul.f32 %v1497, 1.442695
  %v1504 = vpow.pop %v1503
  %v1505 = vmul.f32 %v1498, 1.442695
  %v1506 = vpow.pop %v1505
  %v1507 = vmul.f32 %v1499, 1.442695
  %v1508 = vpow.pop %v1507
  %v1509 = vmul.f32 %v1500, 1.442695
  %v1510 = vpow.pop %v1509
  %v1511 = vmul.f32 %v1501, 1.442695
  %v1512 = vpow.pop %v1511
  %v1513 = vmul.f32 %v1502, 1.442695
  %v1514 = vpow.pop %v1513
  %v1515 = vadd.f32 %v1504, 1.0
  %v1516 = vadd.f32 %v1506, 1.0
  %v1517 = vadd.f32 %v1508, 1.0
  %v1518 = vadd.f32 %v1510, 1.0
  %v1519 = vadd.f32 %v1512, 1.0
  %v1520 = vadd.f32 %v1514, 1.0
  %v1521 = vrcp.pop %v1515
  %v1522 = vmul.f32 1.0, %v1521
  %v1523 = vrcp.pop %v1516
  %v1524 = vmul.f32 1.0, %v1523
  %v1525 = vrcp.pop %v1517
  %v1526 = vmul.f32 1.0, %v1525
  %v1527 = vrcp.pop %v1518
  %v1528 = vmul.f32 1.0, %v1527
  %v1529 = vrcp.pop %v1519
  %v1530 = vmul.f32 1.0, %v1529
  %v1531 = vrcp.pop %v1520
  %v1532 = vmul.f32 1.0, %v1531
  %v1533 = vtanh.pop %v1492
  %v1534 = vtanh.pop %v1496
  %v1535 = vmul.f32 %v1524, %v1373
  %v1536 = vmul.f32 %v1530, %v1374
  %v1537 = vmul.f32 %v1522, %v1533
  %v1538 = vmul.f32 %v1528, %v1534
  %v1539 = vadd.f32 %v1535, %v1537
  %v1540 = vadd.f32 %v1536, %v1538
  %v1541 = vtanh.pop %v1539
  %v1542 = vtanh.pop %v1540
  %v1543 = vmul.f32 %v1526, %v1541
  %v1544 = vmul.f32 %v1532, %v1542
  %v1545 = vpack.c.bf16 %v1544, %v1543
  %v1547 = vunpack.c.l.b16 %v1545
  %v1548 = vunpack.c.h.b16 %v1545
  %v1549 = vpack.c.b16 %v1547, %v1547
  %v1550 = vpack.c.b16 %v1548, %v1548
  %s1553 = scalar_lea.vmem %s4, 56
  %1554 = vst [vmem:[%s1553] sm:$0xf] %v1549
  %1555 = vst [vmem:[%s1553 + $0x4] sm:$0xf] %v1550
  %1556 = vst [vmem:[#allocation2] sm:$0xff] %v1543
  %1557 = vst [vmem:[#allocation2 + $0x8] sm:$0xff] %v1544
  %1558 = vst [vmem:[#allocation3] sm:$0xff] %v1539
  %1559 = vst [vmem:[#allocation3 + $0x8] sm:$0xff] %v1540
  // Predicated region
  $region22: #{rnn_model_scratch_forward.1} parent=0 // pred_check
    %p1560 = pneg %p21
  $region23: #{rnn_model_scratch_forward.1} parent=0 // pred_check_branch
    %1562 = sbr.rel (%p1560) target = $region25
  $region24: #{rnn_model_scratch_forward.1} parent=0 // pred_region
    %v1563 = vld [vmem:[#allocation2] sm:$0xff]
    %v1564 = vld [vmem:[#allocation2 + $0x8] sm:$0xff]
    %1565 = vst [vmem:[%s5] sm:$0xff] %v1563
    %1566 = vst [vmem:[%s5 + $0x8] sm:$0xff] %v1564
    %v1567 = vld [vmem:[#allocation3] sm:$0xff]
    %v1568 = vld [vmem:[#allocation3 + $0x8] sm:$0xff]
    %1569 = vst [vmem:[%s6] sm:$0xff] %v1567
    %1570 = vst [vmem:[%s6 + $0x8] sm:$0xff] %v1568
  $region25: #{rnn_model_scratch_forward.1} parent=0 // pred_fallthru
    _
  // Predicated region
  $region26: #{rnn_model_scratch_forward.1} parent=0 // pred_check
    _
  $region27: #{rnn_model_scratch_forward.1} parent=0 // pred_check_branch
    %1572 = sbr.rel (0) target = $region29
  $region28: #{rnn_model_scratch_forward.1} parent=0 // pred_region
    _
  $region29: #{rnn_model_scratch_forward.1} parent=0 // pred_fallthru
    _
  // Predicated region
  $region30: #{rnn_model_scratch_forward.1} parent=0 // pred_check
    _
  $region31: #{rnn_model_scratch_forward.1} parent=0 // pred_check_branch
    %1574 = sbr.rel (0) target = $region33
  $region32: #{rnn_model_scratch_forward.1} parent=0 // pred_region
    _
  $region33: #{rnn_model_scratch_forward.1} parent=0 // pred_fallthru
    _
  // Predicated region
  $region34: #{rnn_model_scratch_forward.1} parent=0 // pred_check
    _
  $region35: #{rnn_model_scratch_forward.1} parent=0 // pred_check_branch
    %1576 = sbr.rel (0) target = $region37
  $region36: #{rnn_model_scratch_forward.1} parent=0 // pred_region
    _
  $region37: #{rnn_model_scratch_forward.1} parent=0 // pred_fallthru
    _
  // Predicated region
  $region38: #{rnn_model_scratch_forward.1} parent=0 // pred_check
    _
  $region39: #{rnn_model_scratch_forward.1} parent=0 // pred_check_branch
    %1578 = sbr.rel (0) target = $region41
  $region40: #{rnn_model_scratch_forward.1} parent=0 // pred_region
    _
  $region41: #{rnn_model_scratch_forward.1} parent=0 // pred_fallthru
    _
  // Predicated region
  $region42: #{rnn_model_scratch_forward.1} parent=0 // pred_check
    _
  $region43: #{rnn_model_scratch_forward.1} parent=0 // pred_check_branch
    %1580 = sbr.rel (0) target = $region45
  $region44: #{rnn_model_scratch_forward.1} parent=0 // pred_region
    _
  $region45: #{rnn_model_scratch_forward.1} parent=0 // pred_fallthru
    _
  // Predicated region
  $region46: #{rnn_model_scratch_forward.1} parent=0 // pred_check
    _
  $region47: #{rnn_model_scratch_forward.1} parent=0 // pred_check_branch
    %1582 = sbr.rel (0) target = $region49
  $region48: #{rnn_model_scratch_forward.1} parent=0 // pred_region
    _
  $region49: #{rnn_model_scratch_forward.1} parent=0 // pred_fallthru
    _

</llo_original>
